<compile_context>
chip_gen: v5e
topology: v5e:2x2
jax: 0.10.0
libtpu: 0.0.40
codegen_flags: <defaults>
</compile_context>

<pallas_src>
import functools

import jax
import jax.numpy as jnp
from jax.experimental import pallas as pl
from jax.experimental.pallas import tpu as pltpu

LN_EPS = 1e-5        # PyTorch nn.LayerNorm default eps
NEG_BIG = -1e30      # pad-lane logit bias (softmax -> exactly 0 probability)
OUT_W = 128          # lane-dense packed output width
ACTOR_PAD = 128      # actor head padded to a full 128-lane tile
CRITIC_PAD = 128     # critic L2 padded to a full 128-lane tile (64 valid lanes)


# ----------------------------- kernel helpers ------------------------------
def _mxu_rowsum(x, ones_col):
    # Lane-axis row sum on the MXU (frees the XLU, which is the binding unit).
    return jnp.dot(x, ones_col, preferred_element_type=jnp.float32)


def _ln_mxu(x, gamma, beta, ones_col, inv_n):
    # PyTorch LayerNorm (biased variance), mean/var row-sums computed on the MXU.
    # ones_col may be a 0/1 mask column so padded lanes are excluded exactly.
    mu = _mxu_rowsum(x, ones_col) * inv_n
    d = x - mu
    var = _mxu_rowsum(d * d, ones_col) * inv_n
    return d * jax.lax.rsqrt(var + LN_EPS) * gamma + beta


def _ln_relu_mxu(x, w, b, g, be, ones_col, inv_n):
    y = jnp.dot(x, w, preferred_element_type=jnp.float32) + b
    return jnp.maximum(_ln_mxu(y, g, be, ones_col, inv_n), 0.0)


# --------------------------------- kernel ----------------------------------
def ppo_kernel(action_dim,
               state_ref,          # (bt, S)      batch tile
               w_f1_ref,           # (S, 256)     fused [actor L1 | critic L1] weights
               w2_ref,             # (128, 256)   actor L2
               w3_ref,             # (256, 128)   actor L3
               wa_ref,             # (128, 128)   actor head, zero-padded beyond A
               wc2_ref,            # (128, 128)   critic L2, zero-padded beyond 64
               vec_ref,            # (16, 256)    packed bias/gamma/beta/head table
               out_ref):           # (bt, 128)    packed [probs | value | 0...]
    x = state_ref[...].astype(jnp.float32)

    # Constant ones / mask columns for MXU row-sums (splat/iota constants).
    ones_128 = jnp.ones((128, 1), jnp.float32)
    ones_256 = jnp.ones((256, 1), jnp.float32)
    mask_64 = (jax.lax.broadcasted_iota(jnp.int32, (128, 1), 0) < 64).astype(jnp.float32)

    # Packed vector table: read once, all slices are 128-lane aligned.
    vecs = vec_ref[...]
    b_f1, g_f1, be_f1 = vecs[0:1, :], vecs[1:2, :], vecs[2:3, :]
    b2, g2, be2 = vecs[3:4, :], vecs[4:5, :], vecs[5:6, :]
    b3, ba = vecs[6:7, :128], vecs[6:7, 128:]
    g3, be3 = vecs[7:8, :128], vecs[7:8, 128:]
    bc2, gc2 = vecs[8:9, :128], vecs[8:9, 128:]
    bec2, wc3 = vecs[9:10, :128], vecs[9:10, 128:]   # bec2 lane 64 == 1; wc3 lane 64 == bc3

    # ----- fused first layer (actor branch | critic branch), split at lane 128 -----
    pre1 = jnp.dot(x, w_f1_ref[...], preferred_element_type=jnp.float32) + b_f1
    h = jnp.maximum(
        _ln_mxu(pre1[:, :128], g_f1[:, :128], be_f1[:, :128], ones_128, 1.0 / 128.0), 0.0)
    c = jnp.maximum(
        _ln_mxu(pre1[:, 128:], g_f1[:, 128:], be_f1[:, 128:], ones_128, 1.0 / 128.0), 0.0)

    # ----- actor base layers 2 & 3 -----
    h = _ln_relu_mxu(h, w2_ref[...], b2, g2, be2, ones_256, 1.0 / 256.0)   # (bt, 256)
    h = _ln_relu_mxu(h, w3_ref[...], b3, g3, be3, ones_128, 1.0 / 128.0)   # (bt, 128)

    # ----- actor head: padded Linear + Softmax on a full 128-lane tile -----
    logits = jnp.dot(h, wa_ref[...], preferred_element_type=jnp.float32) + ba
    m = jnp.max(logits, axis=-1, keepdims=True)        # only remaining XLU reduce
    e = jnp.exp(logits - m)                            # pad lanes -> exactly 0
    denom = _mxu_rowsum(e, ones_128)                   # softmax denom on MXU
    inv = pl.reciprocal(denom, approx=True)            # EUP seed ...
    inv = inv * (2.0 - denom * inv)                    # ... + one Newton step -> f32 accuracy
    probs = e * inv                                    # (bt, 128); pads stay 0

    # ----- critic L2 (128-lane padded, 64 valid) + fused Linear(64 -> 1) -----
    # Pad lanes of the pre-LN activation are exactly 0 (zero pad cols/bias); the
    # LN statistics use mask_64 so only the 64 valid lanes contribute.  Lane 64 of
    # the post-LN/ReLU output is forced to 1 (gamma=0, beta=1), so the row-wise dot
    # with wc3 (whose lane 64 holds bc3) yields value + bc3 in a single MXU op.
    c = _ln_relu_mxu(c, wc2_ref[...], bc2, gc2, bec2, mask_64, 1.0 / 64.0)  # (bt, 128)
    value = _mxu_rowsum(c * wc3, ones_128)                                  # (bt, 1)

    # ----- lane-dense packed write: probs in lanes [0, A), value in lane A -----
    lane = jax.lax.broadcasted_iota(jnp.int32, probs.shape, 1)
    out_ref[...] = (probs + jnp.where(lane == action_dim, value, 0.0)).astype(out_ref.dtype)


# -------------------------------- wrapper ----------------------------------
def _round_up(x, m):
    return (x + m - 1) // m * m


def _cdiv(a, b):
    return -(-a // b)


def ppo_forward(state, kp, *, block_b=1024):
    """Run the fused forward pass.  `kp` comes from pack_params()."""
    B, S = state.shape
    action_dim = kp["action_dim"]

    # Balanced batch tiling: grid = cdiv(B, block_b) tiles of equal (8-aligned)
    # size, so padding is capped at < 8 rows per step.  Guarantee >= 2 grid steps
    # whenever B >= 16 so the "parallel" batch axis can shard across both v7x
    # TensorCores (extra step costs ~0.35us on single-TC chips -> negligible).
    grid_n = max(1, _cdiv(B, block_b))
    if B >= 16:
        grid_n = max(grid_n, 2)
    bt = _round_up(_cdiv(B, grid_n), 8)
    B_pad = grid_n * bt
    if B_pad != B:
        state = jnp.pad(state, ((0, B_pad - B), (0, 0)))

    const = lambda i: (0, 0)   # weights: same block every grid step (VMEM-resident)

    out = pl.pallas_call(
        functools.partial(ppo_kernel, action_dim),
        out_shape=jax.ShapeDtypeStruct((B_pad, OUT_W), jnp.float32),
        grid_spec=pltpu.PrefetchScalarGridSpec(
            num_scalar_prefetch=0,
            grid=(grid_n,),
            in_specs=[
                pl.BlockSpec((bt, S), lambda i: (i, 0)),    # state batch tile
                pl.BlockSpec(kp["w_f1"].shape, const),
                pl.BlockSpec(kp["w2"].shape, const),
                pl.BlockSpec(kp["w3"].shape, const),
                pl.BlockSpec(kp["wa"].shape, const),
                pl.BlockSpec(kp["wc2"].shape, const),
                pl.BlockSpec(kp["vecs"].shape, const),
            ],
            out_specs=pl.BlockSpec((bt, OUT_W), lambda i: (i, 0)),
        ),
        compiler_params=pltpu.CompilerParams(
            dimension_semantics=("parallel",),   # dual-TC sharding on v7x
        ),
    )(state, kp["w_f1"], kp["w2"], kp["w3"], kp["wa"], kp["wc2"], kp["vecs"])

    probs = out[:B, :action_dim]
    value = out[:B, action_dim:action_dim + 1]
    return probs, value


# --------------------- pack PyTorch-layout params for the kernel ------------
def pack_params(p, state_dim, action_dim):
    assert action_dim < OUT_W, "packed output assumes action_dim + 1 <= 128"
    f32 = jnp.float32

    # Fused first-layer weight: [actor Linear(S,128) | critic Linear(S,128)].
    w_f1 = jnp.concatenate([p["w1"], p["wc1"]], axis=1).astype(f32)      # (S, 256)

    # Actor head padded to 128 output lanes; pad-lane bias = -1e30.
    wa = jnp.zeros((128, ACTOR_PAD), f32).at[:, :action_dim].set(p["wa"].astype(f32))
    ba = jnp.full((1, ACTOR_PAD), NEG_BIG, f32).at[:, :action_dim].set(p["ba"].astype(f32))

    # Critic L2 padded to 128 output lanes (pad cols zero -> pad pre-activations = 0).
    wc2 = jnp.zeros((128, CRITIC_PAD), f32).at[:, :64].set(p["wc2"].astype(f32))

    # Packed (16, 256) vector table; every kernel slice is 128-lane aligned.
    vecs = jnp.zeros((16, 256), f32)
    vecs = vecs.at[0, 0:128].set(p["b1"][0]).at[0, 128:256].set(p["bc1"][0])
    vecs = vecs.at[1, 0:128].set(p["g1"][0]).at[1, 128:256].set(p["gc1"][0])
    vecs = vecs.at[2, 0:128].set(p["be1"][0]).at[2, 128:256].set(p["bec1"][0])
    vecs = vecs.at[3, :].set(p["b2"][0])
    vecs = vecs.at[4, :].set(p["g2"][0])
    vecs = vecs.at[5, :].set(p["be2"][0])
    vecs = vecs.at[6, 0:128].set(p["b3"][0]).at[6, 128:256].set(ba[0])
    vecs = vecs.at[7, 0:128].set(p["g3"][0]).at[7, 128:256].set(p["be3"][0])
    # Critic L2 vectors, each in its own 128-lane half (pads zero).
    vecs = vecs.at[8, 0:64].set(p["bc2"][0])            # bc2  | zeros
    vecs = vecs.at[8, 128:192].set(p["gc2"][0])         # gc2  | zeros
    vecs = vecs.at[9, 0:64].set(p["bec2"][0])           # bec2 | ...
    vecs = vecs.at[9, 64].set(1.0)                      # constant-1 lane (bc3 fold)
    vecs = vecs.at[9, 128:192].set(p["wc3_t"][0])       # wc3  | ...
    vecs = vecs.at[9, 192].set(p["bc3"][0, 0])          # bc3 at lane 64 of wc3 half

    # TODO(synk): on v6e/v7x, storing w_f1/w2/w3/wa/wc2 as bf16 (f32 accumulate)
    # halves weight VMEM/DMA and avoids multi-pass f32 MXU; kept f32 here to
    # preserve exact PyTorch-f32 semantics and the 1e-4 check.
    return {
        "action_dim": action_dim,
        "w_f1": w_f1,
        "w2": p["w2"].astype(f32),
        "w3": p["w3"].astype(f32),
        "wa": wa,
        "wc2": wc2,
        "vecs": vecs,
    }


# ----------------------- deterministic parameter init ----------------------
def init_params(key, state_dim, action_dim):
    def nrm(k, shape, scale=0.1):
        return scale * jax.random.normal(k, shape, dtype=jnp.float32)

    keys = jax.random.split(key, 16)
    p = {}
    # actor_base
    p["w1"] = nrm(keys[0], (state_dim, 128)); p["b1"] = nrm(keys[1], (1, 128), 0.01)
    p["g1"] = jnp.ones((1, 128), jnp.float32); p["be1"] = jnp.zeros((1, 128), jnp.float32)
    p["w2"] = nrm(keys[2], (128, 256));        p["b2"] = nrm(keys[3], (1, 256), 0.01)
    p["g2"] = jnp.ones((1, 256), jnp.float32); p["be2"] = jnp.zeros((1, 256), jnp.float32)
    p["w3"] = nrm(keys[4], (256, 128));        p["b3"] = nrm(keys[5], (1, 128), 0.01)
    p["g3"] = jnp.ones((1, 128), jnp.float32); p["be3"] = jnp.zeros((1, 128), jnp.float32)
    # actor head
    p["wa"] = nrm(keys[6], (128, action_dim)); p["ba"] = nrm(keys[7], (1, action_dim), 0.01)
    # critic
    p["wc1"] = nrm(keys[8], (state_dim, 128)); p["bc1"] = nrm(keys[9], (1, 128), 0.01)
    p["gc1"] = jnp.ones((1, 128), jnp.float32); p["bec1"] = jnp.zeros((1, 128), jnp.float32)
    p["wc2"] = nrm(keys[10], (128, 64));       p["bc2"] = nrm(keys[11], (1, 64), 0.01)
    p["gc2"] = jnp.ones((1, 64), jnp.float32); p["bec2"] = jnp.zeros((1, 64), jnp.float32)
    # final critic Linear(64 -> 1), stored pre-transposed as (1, 64)
    p["wc3_t"] = nrm(keys[12], (1, 64));       p["bc3"] = nrm(keys[13], (1, 1), 0.01)
    return p


# ---------------------------- pure-JAX reference ----------------------------
def ppo_reference(state, p):
    def ln(x, g, b):
        mu = jnp.mean(x, axis=-1, keepdims=True)
        var = jnp.mean((x - mu) ** 2, axis=-1, keepdims=True)
        return (x - mu) / jnp.sqrt(var + LN_EPS) * g + b

    def blk(x, w, b, g, be):
        return jax.nn.relu(ln(x @ w + b, g, be))

    h = blk(state, p["w1"], p["b1"], p["g1"], p["be1"])
    h = blk(h, p["w2"], p["b2"], p["g2"], p["be2"])
    h = blk(h, p["w3"], p["b3"], p["g3"], p["be3"])
    probs = jax.nn.softmax(h @ p["wa"] + p["ba"], axis=-1)

    c = blk(state, p["wc1"], p["bc1"], p["gc1"], p["bec1"])
    c = blk(c, p["wc2"], p["bc2"], p["gc2"], p["bec2"])
    value = jnp.sum(c * p["wc3_t"], axis=-1, keepdims=True) + p["bc3"]
    return probs, value


if __name__ == "__main__":
    BATCH, STATE_DIM, ACTION_DIM = 8, 16, 4

    key = jax.random.PRNGKey(0)
    k_state, k_params = jax.random.split(key)
    state = jax.random.normal(k_state, (BATCH, STATE_DIM), dtype=jnp.float32)
    params = init_params(k_params, STATE_DIM, ACTION_DIM)
    kparams = pack_params(params, STATE_DIM, ACTION_DIM)

    probs, value = ppo_forward(state, kparams)
    jax.block_until_ready((probs, value))

    ref_probs, ref_value = ppo_reference(state, params)
    assert probs.shape == (BATCH, ACTION_DIM) and value.shape == (BATCH, 1)
    assert jnp.allclose(probs, ref_probs, atol=1e-4, rtol=1e-4)
    assert jnp.allclose(value, ref_value, atol=1e-4, rtol=1e-4)
    assert jnp.allclose(jnp.sum(probs, axis=-1), 1.0, atol=1e-4)

    print("KERNEL_OK")
</pallas_src>

<mosaic_0001>
module attributes {stable_mosaic.version = 11 : i64} {
  func.func @ppo_kernel(%arg0: i32, %arg1: memref<8x16xf32, #tpu.memory_space<vmem>>, %arg2: memref<16x256xf32, #tpu.memory_space<vmem>>, %arg3: memref<128x256xf32, #tpu.memory_space<vmem>>, %arg4: memref<256x128xf32, #tpu.memory_space<vmem>>, %arg5: memref<128x128xf32, #tpu.memory_space<vmem>>, %arg6: memref<128x128xf32, #tpu.memory_space<vmem>>, %arg7: memref<16x256xf32, #tpu.memory_space<vmem>>, %arg8: memref<8x128xf32, #tpu.memory_space<vmem>>) attributes {dimension_semantics = [#tpu.dimension_semantics<parallel>], iteration_bounds = array<i64: 1>, scalar_prefetch = 0 : i64, scratch_operands = 0 : i64, tpu.core_type = #tpu.core_type<tc>, window_params = [{transform_indices = @transform_0, window_bounds = array<i64: 8, 16>}, {pipeline_mode = #tpu.pipeline_mode<synchronous>, transform_indices = @transform_1, window_bounds = array<i64: 16, 256>}, {pipeline_mode = #tpu.pipeline_mode<synchronous>, transform_indices = @transform_2, window_bounds = array<i64: 128, 256>}, {pipeline_mode = #tpu.pipeline_mode<synchronous>, transform_indices = @transform_3, window_bounds = array<i64: 256, 128>}, {pipeline_mode = #tpu.pipeline_mode<synchronous>, transform_indices = @transform_4, window_bounds = array<i64: 128, 128>}, {pipeline_mode = #tpu.pipeline_mode<synchronous>, transform_indices = @transform_5, window_bounds = array<i64: 128, 128>}, {pipeline_mode = #tpu.pipeline_mode<synchronous>, transform_indices = @transform_6, window_bounds = array<i64: 16, 256>}, {transform_indices = @transform_7, window_bounds = array<i64: 8, 128>}]} {
    %c0 = arith.constant 0 : index
    %c0_0 = arith.constant 0 : index
    %0 = vector.load %arg1[%c0, %c0_0] : memref<8x16xf32, #tpu.memory_space<vmem>>, vector<8x16xf32>
    %cst = arith.constant 1.000000e+00 : f32
    %1 = vector.broadcast %cst : f32 to vector<128x1xf32>
    %cst_1 = arith.constant 1.000000e+00 : f32
    %2 = vector.broadcast %cst_1 : f32 to vector<256x1xf32>
    %3 = tpu.iota {dimensions = array<i32: 0>} : vector<128x1xi32>
    %c64_i32 = arith.constant 64 : i32
    %4 = vector.broadcast %c64_i32 : i32 to vector<128x1xi32>
    %5 = arith.cmpi slt, %3, %4 : vector<128x1xi32>
    %6 = arith.extui %5 : vector<128x1xi1> to vector<128x1xi32>
    %7 = arith.sitofp %6 : vector<128x1xi32> to vector<128x1xf32>
    %c0_2 = arith.constant 0 : index
    %c0_3 = arith.constant 0 : index
    %8 = vector.load %arg7[%c0_2, %c0_3] : memref<16x256xf32, #tpu.memory_space<vmem>>, vector<16x256xf32>
    %9 = vector.extract_strided_slice %8 {offsets = [0, 0], sizes = [1, 256], strides = [1, 1]} : vector<16x256xf32> to vector<1x256xf32>
    %10 = vector.extract_strided_slice %8 {offsets = [1, 0], sizes = [1, 256], strides = [1, 1]} : vector<16x256xf32> to vector<1x256xf32>
    %11 = vector.extract_strided_slice %8 {offsets = [2, 0], sizes = [1, 256], strides = [1, 1]} : vector<16x256xf32> to vector<1x256xf32>
    %12 = vector.extract_strided_slice %8 {offsets = [3, 0], sizes = [1, 256], strides = [1, 1]} : vector<16x256xf32> to vector<1x256xf32>
    %13 = vector.extract_strided_slice %8 {offsets = [4, 0], sizes = [1, 256], strides = [1, 1]} : vector<16x256xf32> to vector<1x256xf32>
    %14 = vector.extract_strided_slice %8 {offsets = [5, 0], sizes = [1, 256], strides = [1, 1]} : vector<16x256xf32> to vector<1x256xf32>
    %15 = vector.extract_strided_slice %8 {offsets = [6, 0], sizes = [1, 128], strides = [1, 1]} : vector<16x256xf32> to vector<1x128xf32>
    %16 = vector.extract_strided_slice %8 {offsets = [6, 128], sizes = [1, 128], strides = [1, 1]} : vector<16x256xf32> to vector<1x128xf32>
    %17 = vector.extract_strided_slice %8 {offsets = [7, 0], sizes = [1, 128], strides = [1, 1]} : vector<16x256xf32> to vector<1x128xf32>
    %18 = vector.extract_strided_slice %8 {offsets = [7, 128], sizes = [1, 128], strides = [1, 1]} : vector<16x256xf32> to vector<1x128xf32>
    %19 = vector.extract_strided_slice %8 {offsets = [8, 0], sizes = [1, 128], strides = [1, 1]} : vector<16x256xf32> to vector<1x128xf32>
    %20 = vector.extract_strided_slice %8 {offsets = [8, 128], sizes = [1, 128], strides = [1, 1]} : vector<16x256xf32> to vector<1x128xf32>
    %21 = vector.extract_strided_slice %8 {offsets = [9, 0], sizes = [1, 128], strides = [1, 1]} : vector<16x256xf32> to vector<1x128xf32>
    %22 = vector.extract_strided_slice %8 {offsets = [9, 128], sizes = [1, 128], strides = [1, 1]} : vector<16x256xf32> to vector<1x128xf32>
    %c0_4 = arith.constant 0 : index
    %c0_5 = arith.constant 0 : index
    %23 = vector.load %arg2[%c0_4, %c0_5] : memref<16x256xf32, #tpu.memory_space<vmem>>, vector<16x256xf32>
    %cst_6 = arith.constant dense<0.000000e+00> : vector<8x256xf32>
    %24 = tpu.matmul %0, %23, %cst_6 {dimension_numbers = #tpu.dot_dimension_numbers<[1], [0], [0], [1], [0, 0, 1, 1], [], []>} : vector<8x16xf32>, vector<16x256xf32>, vector<8x256xf32> -> vector<8x256xf32>
    %25 = vector.broadcast %9 : vector<1x256xf32> to vector<8x256xf32>
    %26 = arith.addf %24, %25 : vector<8x256xf32>
    %27 = vector.extract_strided_slice %26 {offsets = [0, 0], sizes = [8, 128], strides = [1, 1]} : vector<8x256xf32> to vector<8x128xf32>
    %28 = vector.extract_strided_slice %10 {offsets = [0, 0], sizes = [1, 128], strides = [1, 1]} : vector<1x256xf32> to vector<1x128xf32>
    %29 = vector.extract_strided_slice %11 {offsets = [0, 0], sizes = [1, 128], strides = [1, 1]} : vector<1x256xf32> to vector<1x128xf32>
    %cst_7 = arith.constant dense<0.000000e+00> : vector<8x1xf32>
    %30 = tpu.matmul %27, %1, %cst_7 {dimension_numbers = #tpu.dot_dimension_numbers<[1], [0], [0], [1], [0, 0, 1, 1], [], []>} : vector<8x128xf32>, vector<128x1xf32>, vector<8x1xf32> -> vector<8x1xf32>
    %cst_8 = arith.constant 7.812500e-03 : f32
    %31 = vector.broadcast %cst_8 : f32 to vector<8x1xf32>
    %32 = arith.mulf %30, %31 : vector<8x1xf32>
    %33 = vector.broadcast %32 : vector<8x1xf32> to vector<8x128xf32>
    %34 = arith.subf %27, %33 : vector<8x128xf32>
    %35 = arith.mulf %34, %34 : vector<8x128xf32>
    %cst_9 = arith.constant dense<0.000000e+00> : vector<8x1xf32>
    %36 = tpu.matmul %35, %1, %cst_9 {dimension_numbers = #tpu.dot_dimension_numbers<[1], [0], [0], [1], [0, 0, 1, 1], [], []>} : vector<8x128xf32>, vector<128x1xf32>, vector<8x1xf32> -> vector<8x1xf32>
    %cst_10 = arith.constant 7.812500e-03 : f32
    %37 = vector.broadcast %cst_10 : f32 to vector<8x1xf32>
    %38 = arith.mulf %36, %37 : vector<8x1xf32>
    %cst_11 = arith.constant 9.99999974E-6 : f32
    %39 = vector.broadcast %cst_11 : f32 to vector<8x1xf32>
    %40 = arith.addf %38, %39 : vector<8x1xf32>
    %41 = math.rsqrt %40 : vector<8x1xf32>
    %42 = vector.broadcast %41 : vector<8x1xf32> to vector<8x128xf32>
    %43 = arith.mulf %34, %42 : vector<8x128xf32>
    %44 = vector.broadcast %28 : vector<1x128xf32> to vector<8x128xf32>
    %45 = arith.mulf %43, %44 : vector<8x128xf32>
    %46 = vector.broadcast %29 : vector<1x128xf32> to vector<8x128xf32>
    %47 = arith.addf %45, %46 : vector<8x128xf32>
    %cst_12 = arith.constant 0.000000e+00 : f32
    %48 = vector.broadcast %cst_12 : f32 to vector<8x128xf32>
    %49 = arith.maximumf %47, %48 : vector<8x128xf32>
    %50 = vector.extract_strided_slice %26 {offsets = [0, 128], sizes = [8, 128], strides = [1, 1]} : vector<8x256xf32> to vector<8x128xf32>
    %51 = vector.extract_strided_slice %10 {offsets = [0, 128], sizes = [1, 128], strides = [1, 1]} : vector<1x256xf32> to vector<1x128xf32>
    %52 = vector.extract_strided_slice %11 {offsets = [0, 128], sizes = [1, 128], strides = [1, 1]} : vector<1x256xf32> to vector<1x128xf32>
    %cst_13 = arith.constant dense<0.000000e+00> : vector<8x1xf32>
    %53 = tpu.matmul %50, %1, %cst_13 {dimension_numbers = #tpu.dot_dimension_numbers<[1], [0], [0], [1], [0, 0, 1, 1], [], []>} : vector<8x128xf32>, vector<128x1xf32>, vector<8x1xf32> -> vector<8x1xf32>
    %cst_14 = arith.constant 7.812500e-03 : f32
    %54 = vector.broadcast %cst_14 : f32 to vector<8x1xf32>
    %55 = arith.mulf %53, %54 : vector<8x1xf32>
    %56 = vector.broadcast %55 : vector<8x1xf32> to vector<8x128xf32>
    %57 = arith.subf %50, %56 : vector<8x128xf32>
    %58 = arith.mulf %57, %57 : vector<8x128xf32>
    %cst_15 = arith.constant dense<0.000000e+00> : vector<8x1xf32>
    %59 = tpu.matmul %58, %1, %cst_15 {dimension_numbers = #tpu.dot_dimension_numbers<[1], [0], [0], [1], [0, 0, 1, 1], [], []>} : vector<8x128xf32>, vector<128x1xf32>, vector<8x1xf32> -> vector<8x1xf32>
    %cst_16 = arith.constant 7.812500e-03 : f32
    %60 = vector.broadcast %cst_16 : f32 to vector<8x1xf32>
    %61 = arith.mulf %59, %60 : vector<8x1xf32>
    %cst_17 = arith.constant 9.99999974E-6 : f32
    %62 = vector.broadcast %cst_17 : f32 to vector<8x1xf32>
    %63 = arith.addf %61, %62 : vector<8x1xf32>
    %64 = math.rsqrt %63 : vector<8x1xf32>
    %65 = vector.broadcast %64 : vector<8x1xf32> to vector<8x128xf32>
    %66 = arith.mulf %57, %65 : vector<8x128xf32>
    %67 = vector.broadcast %51 : vector<1x128xf32> to vector<8x128xf32>
    %68 = arith.mulf %66, %67 : vector<8x128xf32>
    %69 = vector.broadcast %52 : vector<1x128xf32> to vector<8x128xf32>
    %70 = arith.addf %68, %69 : vector<8x128xf32>
    %cst_18 = arith.constant 0.000000e+00 : f32
    %71 = vector.broadcast %cst_18 : f32 to vector<8x128xf32>
    %72 = arith.maximumf %70, %71 : vector<8x128xf32>
    %c0_19 = arith.constant 0 : index
    %c0_20 = arith.constant 0 : index
    %73 = vector.load %arg3[%c0_19, %c0_20] : memref<128x256xf32, #tpu.memory_space<vmem>>, vector<128x256xf32>
    %cst_21 = arith.constant dense<0.000000e+00> : vector<8x256xf32>
    %74 = tpu.matmul %49, %73, %cst_21 {dimension_numbers = #tpu.dot_dimension_numbers<[1], [0], [0], [1], [0, 0, 1, 1], [], []>} : vector<8x128xf32>, vector<128x256xf32>, vector<8x256xf32> -> vector<8x256xf32>
    %75 = vector.broadcast %12 : vector<1x256xf32> to vector<8x256xf32>
    %76 = arith.addf %74, %75 : vector<8x256xf32>
    %cst_22 = arith.constant dense<0.000000e+00> : vector<8x1xf32>
    %77 = tpu.matmul %76, %2, %cst_22 {dimension_numbers = #tpu.dot_dimension_numbers<[1], [0], [0], [1], [0, 0, 1, 1], [], []>} : vector<8x256xf32>, vector<256x1xf32>, vector<8x1xf32> -> vector<8x1xf32>
    %cst_23 = arith.constant 3.906250e-03 : f32
    %78 = vector.broadcast %cst_23 : f32 to vector<8x1xf32>
    %79 = arith.mulf %77, %78 : vector<8x1xf32>
    %80 = vector.broadcast %79 : vector<8x1xf32> to vector<8x256xf32>
    %81 = arith.subf %76, %80 : vector<8x256xf32>
    %82 = arith.mulf %81, %81 : vector<8x256xf32>
    %cst_24 = arith.constant dense<0.000000e+00> : vector<8x1xf32>
    %83 = tpu.matmul %82, %2, %cst_24 {dimension_numbers = #tpu.dot_dimension_numbers<[1], [0], [0], [1], [0, 0, 1, 1], [], []>} : vector<8x256xf32>, vector<256x1xf32>, vector<8x1xf32> -> vector<8x1xf32>
    %cst_25 = arith.constant 3.906250e-03 : f32
    %84 = vector.broadcast %cst_25 : f32 to vector<8x1xf32>
    %85 = arith.mulf %83, %84 : vector<8x1xf32>
    %cst_26 = arith.constant 9.99999974E-6 : f32
    %86 = vector.broadcast %cst_26 : f32 to vector<8x1xf32>
    %87 = arith.addf %85, %86 : vector<8x1xf32>
    %88 = math.rsqrt %87 : vector<8x1xf32>
    %89 = vector.broadcast %88 : vector<8x1xf32> to vector<8x256xf32>
    %90 = arith.mulf %81, %89 : vector<8x256xf32>
    %91 = vector.broadcast %13 : vector<1x256xf32> to vector<8x256xf32>
    %92 = arith.mulf %90, %91 : vector<8x256xf32>
    %93 = vector.broadcast %14 : vector<1x256xf32> to vector<8x256xf32>
    %94 = arith.addf %92, %93 : vector<8x256xf32>
    %cst_27 = arith.constant 0.000000e+00 : f32
    %95 = vector.broadcast %cst_27 : f32 to vector<8x256xf32>
    %96 = arith.maximumf %94, %95 : vector<8x256xf32>
    %c0_28 = arith.constant 0 : index
    %c0_29 = arith.constant 0 : index
    %97 = vector.load %arg4[%c0_28, %c0_29] : memref<256x128xf32, #tpu.memory_space<vmem>>, vector<256x128xf32>
    %cst_30 = arith.constant dense<0.000000e+00> : vector<8x128xf32>
    %98 = tpu.matmul %96, %97, %cst_30 {dimension_numbers = #tpu.dot_dimension_numbers<[1], [0], [0], [1], [0, 0, 1, 1], [], []>} : vector<8x256xf32>, vector<256x128xf32>, vector<8x128xf32> -> vector<8x128xf32>
    %99 = vector.broadcast %15 : vector<1x128xf32> to vector<8x128xf32>
    %100 = arith.addf %98, %99 : vector<8x128xf32>
    %cst_31 = arith.constant dense<0.000000e+00> : vector<8x1xf32>
    %101 = tpu.matmul %100, %1, %cst_31 {dimension_numbers = #tpu.dot_dimension_numbers<[1], [0], [0], [1], [0, 0, 1, 1], [], []>} : vector<8x128xf32>, vector<128x1xf32>, vector<8x1xf32> -> vector<8x1xf32>
    %cst_32 = arith.constant 7.812500e-03 : f32
    %102 = vector.broadcast %cst_32 : f32 to vector<8x1xf32>
    %103 = arith.mulf %101, %102 : vector<8x1xf32>
    %104 = vector.broadcast %103 : vector<8x1xf32> to vector<8x128xf32>
    %105 = arith.subf %100, %104 : vector<8x128xf32>
    %106 = arith.mulf %105, %105 : vector<8x128xf32>
    %cst_33 = arith.constant dense<0.000000e+00> : vector<8x1xf32>
    %107 = tpu.matmul %106, %1, %cst_33 {dimension_numbers = #tpu.dot_dimension_numbers<[1], [0], [0], [1], [0, 0, 1, 1], [], []>} : vector<8x128xf32>, vector<128x1xf32>, vector<8x1xf32> -> vector<8x1xf32>
    %cst_34 = arith.constant 7.812500e-03 : f32
    %108 = vector.broadcast %cst_34 : f32 to vector<8x1xf32>
    %109 = arith.mulf %107, %108 : vector<8x1xf32>
    %cst_35 = arith.constant 9.99999974E-6 : f32
    %110 = vector.broadcast %cst_35 : f32 to vector<8x1xf32>
    %111 = arith.addf %109, %110 : vector<8x1xf32>
    %112 = math.rsqrt %111 : vector<8x1xf32>
    %113 = vector.broadcast %112 : vector<8x1xf32> to vector<8x128xf32>
    %114 = arith.mulf %105, %113 : vector<8x128xf32>
    %115 = vector.broadcast %17 : vector<1x128xf32> to vector<8x128xf32>
    %116 = arith.mulf %114, %115 : vector<8x128xf32>
    %117 = vector.broadcast %18 : vector<1x128xf32> to vector<8x128xf32>
    %118 = arith.addf %116, %117 : vector<8x128xf32>
    %cst_36 = arith.constant 0.000000e+00 : f32
    %119 = vector.broadcast %cst_36 : f32 to vector<8x128xf32>
    %120 = arith.maximumf %118, %119 : vector<8x128xf32>
    %c0_37 = arith.constant 0 : index
    %c0_38 = arith.constant 0 : index
    %121 = vector.load %arg5[%c0_37, %c0_38] : memref<128x128xf32, #tpu.memory_space<vmem>>, vector<128x128xf32>
    %cst_39 = arith.constant dense<0.000000e+00> : vector<8x128xf32>
    %122 = tpu.matmul %120, %121, %cst_39 {dimension_numbers = #tpu.dot_dimension_numbers<[1], [0], [0], [1], [0, 0, 1, 1], [], []>} : vector<8x128xf32>, vector<128x128xf32>, vector<8x128xf32> -> vector<8x128xf32>
    %123 = vector.broadcast %16 : vector<1x128xf32> to vector<8x128xf32>
    %124 = arith.addf %122, %123 : vector<8x128xf32>
    %cst_40 = arith.constant dense<0xFF800000> : vector<8xf32>
    %125 = vector.multi_reduction <maximumf>, %124, %cst_40 [1] : vector<8x128xf32> to vector<8xf32>
    %126 = vector.shape_cast %125 : vector<8xf32> to vector<8x1xf32>
    %127 = vector.broadcast %126 : vector<8x1xf32> to vector<8x128xf32>
    %128 = arith.subf %124, %127 : vector<8x128xf32>
    %129 = math.exp %128 : vector<8x128xf32>
    %cst_41 = arith.constant dense<0.000000e+00> : vector<8x1xf32>
    %130 = tpu.matmul %129, %1, %cst_41 {dimension_numbers = #tpu.dot_dimension_numbers<[1], [0], [0], [1], [0, 0, 1, 1], [], []>} : vector<8x128xf32>, vector<128x1xf32>, vector<8x1xf32> -> vector<8x1xf32>
    %131 = tpu.reciprocal %130 {approx = true} : vector<8x1xf32> -> vector<8x1xf32>
    %132 = arith.mulf %130, %131 : vector<8x1xf32>
    %cst_42 = arith.constant 2.000000e+00 : f32
    %133 = vector.broadcast %cst_42 : f32 to vector<8x1xf32>
    %134 = arith.subf %133, %132 : vector<8x1xf32>
    %135 = arith.mulf %131, %134 : vector<8x1xf32>
    %136 = vector.broadcast %135 : vector<8x1xf32> to vector<8x128xf32>
    %137 = arith.mulf %129, %136 : vector<8x128xf32>
    %c0_43 = arith.constant 0 : index
    %c0_44 = arith.constant 0 : index
    %138 = vector.load %arg6[%c0_43, %c0_44] : memref<128x128xf32, #tpu.memory_space<vmem>>, vector<128x128xf32>
    %cst_45 = arith.constant dense<0.000000e+00> : vector<8x128xf32>
    %139 = tpu.matmul %72, %138, %cst_45 {dimension_numbers = #tpu.dot_dimension_numbers<[1], [0], [0], [1], [0, 0, 1, 1], [], []>} : vector<8x128xf32>, vector<128x128xf32>, vector<8x128xf32> -> vector<8x128xf32>
    %140 = vector.broadcast %19 : vector<1x128xf32> to vector<8x128xf32>
    %141 = arith.addf %139, %140 : vector<8x128xf32>
    %cst_46 = arith.constant dense<0.000000e+00> : vector<8x1xf32>
    %142 = tpu.matmul %141, %7, %cst_46 {dimension_numbers = #tpu.dot_dimension_numbers<[1], [0], [0], [1], [0, 0, 1, 1], [], []>} : vector<8x128xf32>, vector<128x1xf32>, vector<8x1xf32> -> vector<8x1xf32>
    %cst_47 = arith.constant 1.562500e-02 : f32
    %143 = vector.broadcast %cst_47 : f32 to vector<8x1xf32>
    %144 = arith.mulf %142, %143 : vector<8x1xf32>
    %145 = vector.broadcast %144 : vector<8x1xf32> to vector<8x128xf32>
    %146 = arith.subf %141, %145 : vector<8x128xf32>
    %147 = arith.mulf %146, %146 : vector<8x128xf32>
    %cst_48 = arith.constant dense<0.000000e+00> : vector<8x1xf32>
    %148 = tpu.matmul %147, %7, %cst_48 {dimension_numbers = #tpu.dot_dimension_numbers<[1], [0], [0], [1], [0, 0, 1, 1], [], []>} : vector<8x128xf32>, vector<128x1xf32>, vector<8x1xf32> -> vector<8x1xf32>
    %cst_49 = arith.constant 1.562500e-02 : f32
    %149 = vector.broadcast %cst_49 : f32 to vector<8x1xf32>
    %150 = arith.mulf %148, %149 : vector<8x1xf32>
    %cst_50 = arith.constant 9.99999974E-6 : f32
    %151 = vector.broadcast %cst_50 : f32 to vector<8x1xf32>
    %152 = arith.addf %150, %151 : vector<8x1xf32>
    %153 = math.rsqrt %152 : vector<8x1xf32>
    %154 = vector.broadcast %153 : vector<8x1xf32> to vector<8x128xf32>
    %155 = arith.mulf %146, %154 : vector<8x128xf32>
    %156 = vector.broadcast %20 : vector<1x128xf32> to vector<8x128xf32>
    %157 = arith.mulf %155, %156 : vector<8x128xf32>
    %158 = vector.broadcast %21 : vector<1x128xf32> to vector<8x128xf32>
    %159 = arith.addf %157, %158 : vector<8x128xf32>
    %cst_51 = arith.constant 0.000000e+00 : f32
    %160 = vector.broadcast %cst_51 : f32 to vector<8x128xf32>
    %161 = arith.maximumf %159, %160 : vector<8x128xf32>
    %162 = vector.broadcast %22 : vector<1x128xf32> to vector<8x128xf32>
    %163 = arith.mulf %161, %162 : vector<8x128xf32>
    %cst_52 = arith.constant dense<0.000000e+00> : vector<8x1xf32>
    %164 = tpu.matmul %163, %1, %cst_52 {dimension_numbers = #tpu.dot_dimension_numbers<[1], [0], [0], [1], [0, 0, 1, 1], [], []>} : vector<8x128xf32>, vector<128x1xf32>, vector<8x1xf32> -> vector<8x1xf32>
    %165 = tpu.iota {dimensions = array<i32: 1>} : vector<8x128xi32>
    %c4_i32 = arith.constant 4 : i32
    %166 = vector.broadcast %c4_i32 : i32 to vector<8x128xi32>
    %167 = arith.cmpi eq, %165, %166 : vector<8x128xi32>
    %cst_53 = arith.constant 0.000000e+00 : f32
    %168 = vector.shape_cast %164 : vector<8x1xf32> to vector<8x1xf32>
    %169 = vector.broadcast %168 : vector<8x1xf32> to vector<8x128xf32>
    %170 = vector.broadcast %cst_53 : f32 to vector<8x128xf32>
    %171 = arith.select %167, %169, %170 : vector<8x128xi1>, vector<8x128xf32>
    %172 = arith.addf %137, %171 : vector<8x128xf32>
    %c0_54 = arith.constant 0 : index
    %c0_55 = arith.constant 0 : index
    %173 = vector.load %arg8[%c0_54, %c0_55] : memref<8x128xf32, #tpu.memory_space<vmem>>, vector<8x128xf32>
    tpu.vector_store %arg8[%c0_54, %c0_55], %172 {strides = array<i32>} : memref<8x128xf32, #tpu.memory_space<vmem>>, vector<8x128xf32>,
    return
  }
  func.func @transform_0(%arg0: i32) -> (i32, i32) {
    %c0_i32 = arith.constant 0 : i32
    %c0_i32_0 = arith.constant 0 : i32
    return %arg0, %c0_i32 : i32, i32
  }
  func.func @transform_1(%arg0: i32) -> (i32, i32) {
    %c0_i32 = arith.constant 0 : i32
    %c0_i32_0 = arith.constant 0 : i32
    %c0_i32_1 = arith.constant 0 : i32
    return %c0_i32, %c0_i32_0 : i32, i32
  }
  func.func @transform_2(%arg0: i32) -> (i32, i32) {
    %c0_i32 = arith.constant 0 : i32
    %c0_i32_0 = arith.constant 0 : i32
    %c0_i32_1 = arith.constant 0 : i32
    return %c0_i32, %c0_i32_0 : i32, i32
  }
  func.func @transform_3(%arg0: i32) -> (i32, i32) {
    %c0_i32 = arith.constant 0 : i32
    %c0_i32_0 = arith.constant 0 : i32
    %c0_i32_1 = arith.constant 0 : i32
    return %c0_i32, %c0_i32_0 : i32, i32
  }
  func.func @transform_4(%arg0: i32) -> (i32, i32) {
    %c0_i32 = arith.constant 0 : i32
    %c0_i32_0 = arith.constant 0 : i32
    %c0_i32_1 = arith.constant 0 : i32
    return %c0_i32, %c0_i32_0 : i32, i32
  }
  func.func @transform_5(%arg0: i32) -> (i32, i32) {
    %c0_i32 = arith.constant 0 : i32
    %c0_i32_0 = arith.constant 0 : i32
    %c0_i32_1 = arith.constant 0 : i32
    return %c0_i32, %c0_i32_0 : i32, i32
  }
  func.func @transform_6(%arg0: i32) -> (i32, i32) {
    %c0_i32 = arith.constant 0 : i32
    %c0_i32_0 = arith.constant 0 : i32
    %c0_i32_1 = arith.constant 0 : i32
    return %c0_i32, %c0_i32_0 : i32, i32
  }
  func.func @transform_7(%arg0: i32) -> (i32, i32) {
    %c0_i32 = arith.constant 0 : i32
    %c0_i32_0 = arith.constant 0 : i32
    return %arg0, %c0_i32 : i32, i32
  }
}

</mosaic_0001>

<llo_original>
// kernel: tpu_custom_call.1
$region0: #{tpu_custom_call.1}
  #allocation0 [shape = 'u32[]', space=smem, size = 0x4, offset = 0x4, fixed_abs, tag = 'smem constant byte address 0x4 - core index']
  #allocation1 [shape = 'u32[72,128]{1,0:T(1,128)}', space=vmem, size = 0x9000, scoped, tag = 'internal scratch']
  %s0 = inlined_call_operand.hbm [shape: f32[8,16], index: 0, kind: input, shape index: {}]
  %s1 = inlined_call_operand.hbm [shape: f32[16,256], index: 1, kind: input, shape index: {}]
  %s2 = inlined_call_operand.hbm [shape: f32[128,256], index: 2, kind: input, shape index: {}]
  %s3 = inlined_call_operand.hbm [shape: f32[256,128], index: 3, kind: input, shape index: {}]
  %s4 = inlined_call_operand.hbm [shape: f32[128,128], index: 4, kind: input, shape index: {}]
  %s5 = inlined_call_operand.hbm [shape: f32[128,128], index: 5, kind: input, shape index: {}]
  %s6 = inlined_call_operand.hbm [shape: f32[16,256], index: 6, kind: input, shape index: {}]
  %s7 = inlined_call_operand.hbm [shape: f32[8,128], index: 7, kind: output, shape index: {}]
  %s8 = sld [smem:[#allocation0]]
  $region66: #{tpu_custom_call.1} parent=0
    _
  %s10 = ssub.s32 1, %s8
  %s11 = scalar_select 0, %s10, %s8
  $region1: #{tpu_custom_call.1} parent=0
    #allocation2 [shape = 'u8[4096]{0}', space=vmem, size = 0x1000, scoped, tag = 'input window, operand 0, single buffered']
    #allocation3 [shape = 's32[1]{0}', space=sflag, size = 0x4, scoped, tag = 'scoped memory for tpu_custom_call.1']
    #allocation4 [shape = 's32[1]{0}', space=sflag, size = 0x4, scoped, tag = 'scoped memory for tpu_custom_call.1']
    #allocation5 [shape = 'u8[16384]{0}', space=vmem, size = 0x4000, scoped, tag = 'input window, operand 1, single buffered']
    #allocation6 [shape = 's32[1]{0}', space=sflag, size = 0x4, scoped, tag = 'scoped memory for tpu_custom_call.1']
    #allocation7 [shape = 'u8[131072]{0}', space=vmem, size = 0x20000, scoped, tag = 'input window, operand 2, single buffered']
    #allocation8 [shape = 'u8[131072]{0}', space=vmem, size = 0x20000, scoped, tag = 'input window, operand 3, single buffered']
    #allocation9 [shape = 's32[1]{0}', space=sflag, size = 0x4, scoped, tag = 'scoped memory for tpu_custom_call.1']
    #allocation10 [shape = 'u8[65536]{0}', space=vmem, size = 0x10000, scoped, tag = 'input window, operand 4, single buffered']
    #allocation11 [shape = 'u8[65536]{0}', space=vmem, size = 0x10000, scoped, tag = 'input window, operand 5, single buffered']
    #allocation12 [shape = 's32[1]{0}', space=sflag, size = 0x4, scoped, tag = 'scoped memory for tpu_custom_call.1']
    #allocation13 [shape = 'u8[16384]{0}', space=vmem, size = 0x4000, scoped, tag = 'input window, operand 6, single buffered']
    #allocation14 [shape = 'u8[4096]{0}', space=vmem, size = 0x1000, scoped, tag = 'output window, operand 0, single buffered']
    %12 = vsyncpa [#allocation3], 0
    %13 = vsyncpa [#allocation6], 0
    %14 = vsyncpa [#allocation9], 0
    %15 = vsyncpa [#allocation12], 0
    %16 = vsyncpa [#allocation4], 0
    // Predicated region
    $region2: #{tpu_custom_call.1} parent=1 // pred_check
      _
    $region3: #{tpu_custom_call.1} parent=1 // pred_check_branch
      %18 = sbr.rel (0) target = $region5
    $region4: #{tpu_custom_call.1} parent=1 // pred_region
      %20 = vsyncadd [#allocation3], 0
      %s22 = sshll.u32 %s0, 4
      %s23 = int_to_ptr.hbm [resolvable:$true] %s22
      %s24 = sshll.u32 [#allocation2], 4
      %s25 = int_to_ptr.vmem [resolvable:$true] %s24
      %27 = dma.hbm_to_vmem [thread:$0]  %s23, 128, %s25, [#allocation3]
    $region5: #{tpu_custom_call.1} parent=1 // pred_fallthru
      _
    // Predicated region
    $region6: #{tpu_custom_call.1} parent=1 // pred_check
      _
    $region7: #{tpu_custom_call.1} parent=1 // pred_check_branch
      %29 = sbr.rel (0) target = $region9
    $region8: #{tpu_custom_call.1} parent=1 // pred_region
      %31 = vsyncadd [#allocation6], 0
      %s32 = sshll.u32 %s1, 4
      %s33 = int_to_ptr.hbm [resolvable:$true] %s32
      %s34 = sshll.u32 [#allocation5], 4
      %s35 = int_to_ptr.vmem [resolvable:$true] %s34
      %40 = dma.hbm_to_vmem [thread:$0]  %s33, 512, %s35, [#allocation6], 256, 256, 16
    $region9: #{tpu_custom_call.1} parent=1 // pred_fallthru
      _
    // Predicated region
    $region10: #{tpu_custom_call.1} parent=1 // pred_check
      _
    $region11: #{tpu_custom_call.1} parent=1 // pred_check_branch
      %42 = sbr.rel (0) target = $region13
    $region12: #{tpu_custom_call.1} parent=1 // pred_region
      %44 = vsyncadd [#allocation6], 0
      %s45 = sshll.u32 %s2, 4
      %s46 = int_to_ptr.hbm [resolvable:$true] %s45
      %s47 = sshll.u32 [#allocation7], 4
      %s48 = int_to_ptr.vmem [resolvable:$true] %s47
      %53 = dma.hbm_to_vmem [thread:$0]  %s46, 4096, %s48, [#allocation6], 256, 256, 16
    $region13: #{tpu_custom_call.1} parent=1 // pred_fallthru
      _
    // Predicated region
    $region14: #{tpu_custom_call.1} parent=1 // pred_check
      _
    $region15: #{tpu_custom_call.1} parent=1 // pred_check_branch
      %55 = sbr.rel (0) target = $region17
    $region16: #{tpu_custom_call.1} parent=1 // pred_region
      %57 = vsyncadd [#allocation9], 0
      %s58 = sshll.u32 %s3, 4
      %s59 = int_to_ptr.hbm [resolvable:$true] %s58
      %s60 = sshll.u32 [#allocation8], 4
      %s61 = int_to_ptr.vmem [resolvable:$true] %s60
      %66 = dma.hbm_to_vmem [thread:$0]  %s59, 4096, %s61, [#allocation9], 128, 128, 8
    $region17: #{tpu_custom_call.1} parent=1 // pred_fallthru
      _
    // Predicated region
    $region18: #{tpu_custom_call.1} parent=1 // pred_check
      _
    $region19: #{tpu_custom_call.1} parent=1 // pred_check_branch
      %68 = sbr.rel (0) target = $region21
    $region20: #{tpu_custom_call.1} parent=1 // pred_region
      %70 = vsyncadd [#allocation9], 0
      %s71 = sshll.u32 %s4, 4
      %s72 = int_to_ptr.hbm [resolvable:$true] %s71
      %s73 = sshll.u32 [#allocation10], 4
      %s74 = int_to_ptr.vmem [resolvable:$true] %s73
      %79 = dma.hbm_to_vmem [thread:$0]  %s72, 2048, %s74, [#allocation9], 128, 128, 8
    $region21: #{tpu_custom_call.1} parent=1 // pred_fallthru
      _
    // Predicated region
    $region22: #{tpu_custom_call.1} parent=1 // pred_check
      _
    $region23: #{tpu_custom_call.1} parent=1 // pred_check_branch
      %81 = sbr.rel (0) target = $region25
    $region24: #{tpu_custom_call.1} parent=1 // pred_region
      %83 = vsyncadd [#allocation12], 0
      %s84 = sshll.u32 %s5, 4
      %s85 = int_to_ptr.hbm [resolvable:$true] %s84
      %s86 = sshll.u32 [#allocation11], 4
      %s87 = int_to_ptr.vmem [resolvable:$true] %s86
      %92 = dma.hbm_to_vmem [thread:$0]  %s85, 2048, %s87, [#allocation12], 128, 128, 8
    $region25: #{tpu_custom_call.1} parent=1 // pred_fallthru
      _
    // Predicated region
    $region26: #{tpu_custom_call.1} parent=1 // pred_check
      _
    $region27: #{tpu_custom_call.1} parent=1 // pred_check_branch
      %94 = sbr.rel (0) target = $region29
    $region28: #{tpu_custom_call.1} parent=1 // pred_region
      %96 = vsyncadd [#allocation12], 0
      %s97 = sshll.u32 %s6, 4
      %s98 = int_to_ptr.hbm [resolvable:$true] %s97
      %s99 = sshll.u32 [#allocation13], 4
      %s100 = int_to_ptr.vmem [resolvable:$true] %s99
      %105 = dma.hbm_to_vmem [thread:$0]  %s98, 512, %s100, [#allocation12], 256, 256, 16
    $region29: #{tpu_custom_call.1} parent=1 // pred_fallthru
      _
    // Predicated region
    $region30: #{tpu_custom_call.1} parent=1 // pred_check
      _
    $region31: #{tpu_custom_call.1} parent=1 // pred_check_branch
      %107 = sbr.rel (0) target = $region33
    $region32: #{tpu_custom_call.1} parent=1 // pred_region
      %109 = dma.done [#allocation3], 128
    $region33: #{tpu_custom_call.1} parent=1 // pred_fallthru
      _
    // Predicated region
    $region34: #{tpu_custom_call.1} parent=1 // pred_check
      _
    $region35: #{tpu_custom_call.1} parent=1 // pred_check_branch
      %111 = sbr.rel (0) target = $region37
    $region36: #{tpu_custom_call.1} parent=1 // pred_region
      %113 = dma.done [#allocation6], 512
    $region37: #{tpu_custom_call.1} parent=1 // pred_fallthru
      _
    // Predicated region
    $region38: #{tpu_custom_call.1} parent=1 // pred_check
      _
    $region39: #{tpu_custom_call.1} parent=1 // pred_check_branch
      %115 = sbr.rel (0) target = $region41
    $region40: #{tpu_custom_call.1} parent=1 // pred_region
      %117 = dma.done [#allocation6], 4096
    $region41: #{tpu_custom_call.1} parent=1 // pred_fallthru
      _
    // Predicated region
    $region42: #{tpu_custom_call.1} parent=1 // pred_check
      _
    $region43: #{tpu_custom_call.1} parent=1 // pred_check_branch
      %119 = sbr.rel (0) target = $region45
    $region44: #{tpu_custom_call.1} parent=1 // pred_region
      %121 = dma.done [#allocation9], 4096
    $region45: #{tpu_custom_call.1} parent=1 // pred_fallthru
      _
    // Predicated region
    $region46: #{tpu_custom_call.1} parent=1 // pred_check
      _
    $region47: #{tpu_custom_call.1} parent=1 // pred_check_branch
      %123 = sbr.rel (0) target = $region49
    $region48: #{tpu_custom_call.1} parent=1 // pred_region
      %125 = dma.done [#allocation9], 2048
    $region49: #{tpu_custom_call.1} parent=1 // pred_fallthru
      _
    // Predicated region
    $region50: #{tpu_custom_call.1} parent=1 // pred_check
      _
    $region51: #{tpu_custom_call.1} parent=1 // pred_check_branch
      %127 = sbr.rel (0) target = $region53
    $region52: #{tpu_custom_call.1} parent=1 // pred_region
      %129 = dma.done [#allocation12], 2048
    $region53: #{tpu_custom_call.1} parent=1 // pred_fallthru
      _
    // Predicated region
    $region54: #{tpu_custom_call.1} parent=1 // pred_check
      _
    $region55: #{tpu_custom_call.1} parent=1 // pred_check_branch
      %131 = sbr.rel (0) target = $region57
    $region56: #{tpu_custom_call.1} parent=1 // pred_region
      %133 = dma.done [#allocation12], 512
    $region57: #{tpu_custom_call.1} parent=1 // pred_fallthru
      _
    %v134 = vld [vmem:[#allocation2] sm:$0xff]
    %v135 = vlaneseq
    %v136 = vshrl.u32 %v135, 7
    %v137 = vadd.s32 %v136, 8
    %v138 = vadd.s32 %v136, 16
    %v139 = vadd.s32 %v136, 24
    %v140 = vadd.s32 %v136, 32
    %v141 = vadd.s32 %v136, 40
    %v142 = vadd.s32 %v136, 48
    %v143 = vadd.s32 %v136, 56
    %v144 = vadd.s32 %v136, 64
    %v145 = vadd.s32 %v136, 72
    %v146 = vadd.s32 %v136, 80
    %v147 = vadd.s32 %v136, 88
    %v148 = vadd.s32 %v136, 96
    %v149 = vadd.s32 %v136, 104
    %v150 = vadd.s32 %v136, 112
    %v151 = vadd.s32 %v136, 120
    %vm152 = vcmp.lt.s32.totalorder %v136, 64
    %vm153 = vcmp.lt.s32.totalorder %v137, 64
    %vm154 = vcmp.lt.s32.totalorder %v138, 64
    %vm155 = vcmp.lt.s32.totalorder %v139, 64
    %vm156 = vcmp.lt.s32.totalorder %v140, 64
    %vm157 = vcmp.lt.s32.totalorder %v141, 64
    %vm158 = vcmp.lt.s32.totalorder %v142, 64
    %vm159 = vcmp.lt.s32.totalorder %v143, 64
    %vm160 = vcmp.lt.s32.totalorder %v144, 64
    %vm161 = vcmp.lt.s32.totalorder %v145, 64
    %vm162 = vcmp.lt.s32.totalorder %v146, 64
    %vm163 = vcmp.lt.s32.totalorder %v147, 64
    %vm164 = vcmp.lt.s32.totalorder %v148, 64
    %vm165 = vcmp.lt.s32.totalorder %v149, 64
    %vm166 = vcmp.lt.s32.totalorder %v150, 64
    %vm167 = vcmp.lt.s32.totalorder %v151, 64
    %v168 = vsel %vm152, 1, 0
    %v169 = vsel %vm153, 1, 0
    %v170 = vsel %vm154, 1, 0
    %v171 = vsel %vm155, 1, 0
    %v172 = vsel %vm156, 1, 0
    %v173 = vsel %vm157, 1, 0
    %v174 = vsel %vm158, 1, 0
    %v175 = vsel %vm159, 1, 0
    %v176 = vsel %vm160, 1, 0
    %v177 = vsel %vm161, 1, 0
    %v178 = vsel %vm162, 1, 0
    %v179 = vsel %vm163, 1, 0
    %v180 = vsel %vm164, 1, 0
    %v181 = vsel %vm165, 1, 0
    %v182 = vsel %vm166, 1, 0
    %v183 = vsel %vm167, 1, 0
    %v184 = vcvt.s32.f32 %v168
    %v185 = vcvt.s32.f32 %v169
    %v186 = vcvt.s32.f32 %v170
    %v187 = vcvt.s32.f32 %v171
    %v188 = vcvt.s32.f32 %v172
    %v189 = vcvt.s32.f32 %v173
    %v190 = vcvt.s32.f32 %v174
    %v191 = vcvt.s32.f32 %v175
    %v192 = vcvt.s32.f32 %v176
    %v193 = vcvt.s32.f32 %v177
    %v194 = vcvt.s32.f32 %v178
    %v195 = vcvt.s32.f32 %v179
    %v196 = vcvt.s32.f32 %v180
    %v197 = vcvt.s32.f32 %v181
    %v198 = vcvt.s32.f32 %v182
    %v199 = vcvt.s32.f32 %v183
    %v200 = vld [vmem:[#allocation13] sm:$0xff]
    %v201 = vld [vmem:[#allocation13 + $0x8] sm:$0xff]
    %v202 = vld [vmem:[#allocation13 + $0x10] sm:$0xff]
    %v203 = vld [vmem:[#allocation13 + $0x18] sm:$0xff]
    %v204 = vld [vmem:[#allocation5] sm:$0xff]
    %v205 = vld [vmem:[#allocation5 + $0x8] sm:$0xff]
    %v206 = vld [vmem:[#allocation5 + $0x10] sm:$0xff]
    %v207 = vld [vmem:[#allocation5 + $0x18] sm:$0xff]
    %v208 = vperm.slane %v200, 0
    %v209 = vperm.slane %v201, 0
    %vm210 = vcmask 130048
    %v212 = vsel %vm210, %v134, 0
    %214 = vmatpush.msra.mxu0 0.0
    %215 = vmatpush.msra.mxu0 0.0
    %216 = vmatpush.msra.mxu0 0.0
    %217 = vmatpush.msra.mxu0 0.0
    %218 = vmatpush.msra.mxu0 0.0
    %219 = vmatpush.msra.mxu0 0.0
    %220 = vmatpush.msra.mxu0 0.0
    %221 = vmatpush.msra.mxu0 0.0
    %222 = vmatpush.msra.mxu0 0.0
    %223 = vmatpush.msra.mxu0 0.0
    %224 = vmatpush.msra.mxu0 0.0
    %225 = vmatpush.msra.mxu0 0.0
    %226 = vmatpush.msra.mxu0 0.0
    %227 = vmatpush.msra.mxu0 0.0
    %228 = vmatpush.msra.mxu0 %v206
    %229 = vmatpush.msra.mxu0 %v204
    %230 = vmatmul.f32.gmra.mxu0 %v212
    %v231 = vpop.f32.mrf.mxu0
    %v232 = vadd.f32 %v208, %v231
    %233 = vdwg.mxu0
    %234 = vmatpush.msra.mxu0 0.0
    %235 = vmatpush.msra.mxu0 0.0
    %236 = vmatpush.msra.mxu0 0.0
    %237 = vmatpush.msra.mxu0 0.0
    %238 = vmatpush.msra.mxu0 0.0
    %239 = vmatpush.msra.mxu0 0.0
    %240 = vmatpush.msra.mxu0 0.0
    %241 = vmatpush.msra.mxu0 0.0
    %242 = vmatpush.msra.mxu0 0.0
    %243 = vmatpush.msra.mxu0 0.0
    %244 = vmatpush.msra.mxu0 0.0
    %245 = vmatpush.msra.mxu0 0.0
    %246 = vmatpush.msra.mxu0 0.0
    %247 = vmatpush.msra.mxu0 0.0
    %248 = vmatpush.msra.mxu0 %v207
    %249 = vmatpush.msra.mxu0 %v205
    %250 = vmatmul.f32.gmra.mxu0 %v212
    %v251 = vpop.f32.mrf.mxu0
    %v252 = vadd.f32 %v209, %v251
    %253 = vdwg.mxu0
    %254 = vmatpush.msra.mxu0 1.0
    %255 = vmatpush.msra.mxu0 1.0
    %256 = vmatpush.msra.mxu0 1.0
    %257 = vmatpush.msra.mxu0 1.0
    %258 = vmatpush.msra.mxu0 1.0
    %259 = vmatpush.msra.mxu0 1.0
    %260 = vmatpush.msra.mxu0 1.0
    %261 = vmatpush.msra.mxu0 1.0
    %262 = vmatpush.msra.mxu0 1.0
    %263 = vmatpush.msra.mxu0 1.0
    %264 = vmatpush.msra.mxu0 1.0
    %265 = vmatpush.msra.mxu0 1.0
    %266 = vmatpush.msra.mxu0 1.0
    %267 = vmatpush.msra.mxu0 1.0
    %268 = vmatpush.msra.mxu0 1.0
    %269 = vmatpush.msra.mxu0 1.0
    %270 = vmatmul.f32.gmra.mxu0 %v232
    %v271 = vpop.f32.mrf.mxu0
    %v272 = vadd.f32 0.0, %v271
    %273 = vdwg.mxu0
    %v274 = vmul.f32 %v272, 0.0078125
    %276 = vset.pattern.permute.xlu0 0
    %277 = vperm.xlu0 %276, %v274
    %v278 = vpop.permute.xlu0 %277
    %v280 = vsub.f32 %v232, %v278
    %v281 = vmul.f32 %v280, %v280
    %282 = vmatpush.msra.mxu0 1.0
    %283 = vmatpush.msra.mxu0 1.0
    %284 = vmatpush.msra.mxu0 1.0
    %285 = vmatpush.msra.mxu0 1.0
    %286 = vmatpush.msra.mxu0 1.0
    %287 = vmatpush.msra.mxu0 1.0
    %288 = vmatpush.msra.mxu0 1.0
    %289 = vmatpush.msra.mxu0 1.0
    %290 = vmatpush.msra.mxu0 1.0
    %291 = vmatpush.msra.mxu0 1.0
    %292 = vmatpush.msra.mxu0 1.0
    %293 = vmatpush.msra.mxu0 1.0
    %294 = vmatpush.msra.mxu0 1.0
    %295 = vmatpush.msra.mxu0 1.0
    %296 = vmatpush.msra.mxu0 1.0
    %297 = vmatpush.msra.mxu0 1.0
    %298 = vmatmul.f32.gmra.mxu0 %v281
    %v299 = vpop.f32.mrf.mxu0
    %v300 = vadd.f32 0.0, %v299
    %301 = vdwg.mxu0
    %v302 = vmul.f32 %v300, 0.0078125
    %v303 = vadd.f32 %v302, 1e-05
    %v304 = vrsqrt.pop %v303
    %v305 = vmul.f32 %v304, %v303
    %v306 = vmul.f32 %v305, %v304
    %v307 = vmul.f32 0.5, %v306
    %v308 = vsub.f32 1.5, %v307
    %v309 = vmul.f32 %v304, %v308
    %vm310 = vweird.f32 %v303
    %vm311 = vweird.f32 %v304
    %vm312 = vmor %vm310, %vm311
    %v313 = vsel %vm312, %v304, %v309
    %315 = vset.pattern.permute.xlu0 0
    %316 = vperm.xlu0 %315, %v313
    %v317 = vpop.permute.xlu0 %316
    %v319 = vmul.f32 %v280, %v317
    %v320 = vperm.slane %v200, 1
    %v321 = vmul.f32 %v319, %v320
    %v322 = vperm.slane %v200, 2
    %v323 = vadd.f32 %v321, %v322
    %v324 = vmax.f32 %v323, 0.0
    %325 = vmatpush.msra.mxu0 1.0
    %326 = vmatpush.msra.mxu0 1.0
    %327 = vmatpush.msra.mxu0 1.0
    %328 = vmatpush.msra.mxu0 1.0
    %329 = vmatpush.msra.mxu0 1.0
    %330 = vmatpush.msra.mxu0 1.0
    %331 = vmatpush.msra.mxu0 1.0
    %332 = vmatpush.msra.mxu0 1.0
    %333 = vmatpush.msra.mxu0 1.0
    %334 = vmatpush.msra.mxu0 1.0
    %335 = vmatpush.msra.mxu0 1.0
    %336 = vmatpush.msra.mxu0 1.0
    %337 = vmatpush.msra.mxu0 1.0
    %338 = vmatpush.msra.mxu0 1.0
    %339 = vmatpush.msra.mxu0 1.0
    %340 = vmatpush.msra.mxu0 1.0
    %341 = vmatmul.f32.gmra.mxu0 %v252
    %v342 = vpop.f32.mrf.mxu0
    %v343 = vadd.f32 0.0, %v342
    %344 = vdwg.mxu0
    %v345 = vmul.f32 %v343, 0.0078125
    %347 = vset.pattern.permute.xlu0 0
    %348 = vperm.xlu0 %347, %v345
    %v349 = vpop.permute.xlu0 %348
    %v351 = vsub.f32 %v252, %v349
    %v352 = vmul.f32 %v351, %v351
    %353 = vmatpush.msra.mxu0 1.0
    %354 = vmatpush.msra.mxu0 1.0
    %355 = vmatpush.msra.mxu0 1.0
    %356 = vmatpush.msra.mxu0 1.0
    %357 = vmatpush.msra.mxu0 1.0
    %358 = vmatpush.msra.mxu0 1.0
    %359 = vmatpush.msra.mxu0 1.0
    %360 = vmatpush.msra.mxu0 1.0
    %361 = vmatpush.msra.mxu0 1.0
    %362 = vmatpush.msra.mxu0 1.0
    %363 = vmatpush.msra.mxu0 1.0
    %364 = vmatpush.msra.mxu0 1.0
    %365 = vmatpush.msra.mxu0 1.0
    %366 = vmatpush.msra.mxu0 1.0
    %367 = vmatpush.msra.mxu0 1.0
    %368 = vmatpush.msra.mxu0 1.0
    %369 = vmatmul.f32.gmra.mxu0 %v352
    %v370 = vpop.f32.mrf.mxu0
    %v371 = vadd.f32 0.0, %v370
    %372 = vdwg.mxu0
    %v373 = vmul.f32 %v371, 0.0078125
    %v374 = vadd.f32 %v373, 1e-05
    %v375 = vrsqrt.pop %v374
    %v376 = vmul.f32 %v375, %v374
    %v377 = vmul.f32 %v376, %v375
    %v378 = vmul.f32 0.5, %v377
    %v379 = vsub.f32 1.5, %v378
    %v380 = vmul.f32 %v375, %v379
    %vm381 = vweird.f32 %v374
    %vm382 = vweird.f32 %v375
    %vm383 = vmor %vm381, %vm382
    %v384 = vsel %vm383, %v375, %v380
    %386 = vset.pattern.permute.xlu0 0
    %387 = vperm.xlu0 %386, %v384
    %v388 = vpop.permute.xlu0 %387
    %v390 = vmul.f32 %v351, %v388
    %v391 = vperm.slane %v201, 1
    %v392 = vmul.f32 %v390, %v391
    %v393 = vperm.slane %v201, 2
    %v394 = vadd.f32 %v392, %v393
    %v395 = vmax.f32 %v394, 0.0
    %v396 = vld [vmem:[#allocation7] sm:$0xff]
    %v397 = vld [vmem:[#allocation7 + $0x8] sm:$0xff]
    %v398 = vld [vmem:[#allocation7 + $0x10] sm:$0xff]
    %v399 = vld [vmem:[#allocation7 + $0x18] sm:$0xff]
    %v400 = vld [vmem:[#allocation7 + $0x20] sm:$0xff]
    %v401 = vld [vmem:[#allocation7 + $0x28] sm:$0xff]
    %v402 = vld [vmem:[#allocation7 + $0x30] sm:$0xff]
    %v403 = vld [vmem:[#allocation7 + $0x38] sm:$0xff]
    %v404 = vld [vmem:[#allocation7 + $0x40] sm:$0xff]
    %v405 = vld [vmem:[#allocation7 + $0x48] sm:$0xff]
    %v406 = vld [vmem:[#allocation7 + $0x50] sm:$0xff]
    %v407 = vld [vmem:[#allocation7 + $0x58] sm:$0xff]
    %v408 = vld [vmem:[#allocation7 + $0x60] sm:$0xff]
    %v409 = vld [vmem:[#allocation7 + $0x68] sm:$0xff]
    %v410 = vld [vmem:[#allocation7 + $0x70] sm:$0xff]
    %v411 = vld [vmem:[#allocation7 + $0x78] sm:$0xff]
    %v412 = vld [vmem:[#allocation7 + $0x80] sm:$0xff]
    %v413 = vld [vmem:[#allocation7 + $0x88] sm:$0xff]
    %v414 = vld [vmem:[#allocation7 + $0x90] sm:$0xff]
    %v415 = vld [vmem:[#allocation7 + $0x98] sm:$0xff]
    %v416 = vld [vmem:[#allocation7 + $0xa0] sm:$0xff]
    %v417 = vld [vmem:[#allocation7 + $0xa8] sm:$0xff]
    %v418 = vld [vmem:[#allocation7 + $0xb0] sm:$0xff]
    %v419 = vld [vmem:[#allocation7 + $0xb8] sm:$0xff]
    %v420 = vld [vmem:[#allocation7 + $0xc0] sm:$0xff]
    %v421 = vld [vmem:[#allocation7 + $0xc8] sm:$0xff]
    %v422 = vld [vmem:[#allocation7 + $0xd0] sm:$0xff]
    %v423 = vld [vmem:[#allocation7 + $0xd8] sm:$0xff]
    %v424 = vld [vmem:[#allocation7 + $0xe0] sm:$0xff]
    %v425 = vld [vmem:[#allocation7 + $0xe8] sm:$0xff]
    %v426 = vld [vmem:[#allocation7 + $0xf0] sm:$0xff]
    %v427 = vld [vmem:[#allocation7 + $0xf8] sm:$0xff]
    %v428 = vperm.slane %v200, 3
    %v429 = vperm.slane %v201, 3
    %430 = vmatpush.msra.mxu0 %v426
    %431 = vmatpush.msra.mxu0 %v424
    %432 = vmatpush.msra.mxu0 %v422
    %433 = vmatpush.msra.mxu0 %v420
    %434 = vmatpush.msra.mxu0 %v418
    %435 = vmatpush.msra.mxu0 %v416
    %436 = vmatpush.msra.mxu0 %v414
    %437 = vmatpush.msra.mxu0 %v412
    %438 = vmatpush.msra.mxu0 %v410
    %439 = vmatpush.msra.mxu0 %v408
    %440 = vmatpush.msra.mxu0 %v406
    %441 = vmatpush.msra.mxu0 %v404
    %442 = vmatpush.msra.mxu0 %v402
    %443 = vmatpush.msra.mxu0 %v400
    %444 = vmatpush.msra.mxu0 %v398
    %445 = vmatpush.msra.mxu0 %v396
    %446 = vmatmul.f32.gmra.mxu0 %v324
    %v447 = vpop.f32.mrf.mxu0
    %v448 = vadd.f32 %v428, %v447
    %449 = vdwg.mxu0
    %450 = vmatpush.msra.mxu0 %v427
    %451 = vmatpush.msra.mxu0 %v425
    %452 = vmatpush.msra.mxu0 %v423
    %453 = vmatpush.msra.mxu0 %v421
    %454 = vmatpush.msra.mxu0 %v419
    %455 = vmatpush.msra.mxu0 %v417
    %456 = vmatpush.msra.mxu0 %v415
    %457 = vmatpush.msra.mxu0 %v413
    %458 = vmatpush.msra.mxu0 %v411
    %459 = vmatpush.msra.mxu0 %v409
    %460 = vmatpush.msra.mxu0 %v407
    %461 = vmatpush.msra.mxu0 %v405
    %462 = vmatpush.msra.mxu0 %v403
    %463 = vmatpush.msra.mxu0 %v401
    %464 = vmatpush.msra.mxu0 %v399
    %465 = vmatpush.msra.mxu0 %v397
    %466 = vmatmul.f32.gmra.mxu0 %v324
    %v467 = vpop.f32.mrf.mxu0
    %v468 = vadd.f32 %v429, %v467
    %469 = vdwg.mxu0
    %470 = vmatpush.msra.mxu0 1.0
    %471 = vmatpush.msra.mxu0 1.0
    %472 = vmatpush.msra.mxu0 1.0
    %473 = vmatpush.msra.mxu0 1.0
    %474 = vmatpush.msra.mxu0 1.0
    %475 = vmatpush.msra.mxu0 1.0
    %476 = vmatpush.msra.mxu0 1.0
    %477 = vmatpush.msra.mxu0 1.0
    %478 = vmatpush.msra.mxu0 1.0
    %479 = vmatpush.msra.mxu0 1.0
    %480 = vmatpush.msra.mxu0 1.0
    %481 = vmatpush.msra.mxu0 1.0
    %482 = vmatpush.msra.mxu0 1.0
    %483 = vmatpush.msra.mxu0 1.0
    %484 = vmatpush.msra.mxu0 1.0
    %485 = vmatpush.msra.mxu0 1.0
    %486 = vmatmul.f32.gmra.mxu0 %v448
    %v487 = vpop.f32.mrf.mxu0
    %v488 = vadd.f32 0.0, %v487
    %489 = vdwg.mxu0
    %490 = vmatpush.msra.mxu0 1.0
    %491 = vmatpush.msra.mxu0 1.0
    %492 = vmatpush.msra.mxu0 1.0
    %493 = vmatpush.msra.mxu0 1.0
    %494 = vmatpush.msra.mxu0 1.0
    %495 = vmatpush.msra.mxu0 1.0
    %496 = vmatpush.msra.mxu0 1.0
    %497 = vmatpush.msra.mxu0 1.0
    %498 = vmatpush.msra.mxu0 1.0
    %499 = vmatpush.msra.mxu0 1.0
    %500 = vmatpush.msra.mxu0 1.0
    %501 = vmatpush.msra.mxu0 1.0
    %502 = vmatpush.msra.mxu0 1.0
    %503 = vmatpush.msra.mxu0 1.0
    %504 = vmatpush.msra.mxu0 1.0
    %505 = vmatpush.msra.mxu0 1.0
    %506 = vmatmul.f32.gmra.mxu0 %v468
    %v507 = vpop.f32.mrf.mxu0
    %v508 = vadd.f32 %v488, %v507
    %509 = vdwg.mxu0
    %v510 = vmul.f32 %v508, 0.00390625
    %512 = vset.pattern.permute.xlu0 0
    %513 = vperm.xlu0 %512, %v510
    %v514 = vpop.permute.xlu0 %513
    %v516 = vsub.f32 %v448, %v514
    %v517 = vsub.f32 %v468, %v514
    %v518 = vmul.f32 %v516, %v516
    %v519 = vmul.f32 %v517, %v517
    %520 = vmatpush.msra.mxu0 1.0
    %521 = vmatpush.msra.mxu0 1.0
    %522 = vmatpush.msra.mxu0 1.0
    %523 = vmatpush.msra.mxu0 1.0
    %524 = vmatpush.msra.mxu0 1.0
    %525 = vmatpush.msra.mxu0 1.0
    %526 = vmatpush.msra.mxu0 1.0
    %527 = vmatpush.msra.mxu0 1.0
    %528 = vmatpush.msra.mxu0 1.0
    %529 = vmatpush.msra.mxu0 1.0
    %530 = vmatpush.msra.mxu0 1.0
    %531 = vmatpush.msra.mxu0 1.0
    %532 = vmatpush.msra.mxu0 1.0
    %533 = vmatpush.msra.mxu0 1.0
    %534 = vmatpush.msra.mxu0 1.0
    %535 = vmatpush.msra.mxu0 1.0
    %536 = vmatmul.f32.gmra.mxu0 %v518
    %v537 = vpop.f32.mrf.mxu0
    %v538 = vadd.f32 0.0, %v537
    %539 = vdwg.mxu0
    %540 = vmatpush.msra.mxu0 1.0
    %541 = vmatpush.msra.mxu0 1.0
    %542 = vmatpush.msra.mxu0 1.0
    %543 = vmatpush.msra.mxu0 1.0
    %544 = vmatpush.msra.mxu0 1.0
    %545 = vmatpush.msra.mxu0 1.0
    %546 = vmatpush.msra.mxu0 1.0
    %547 = vmatpush.msra.mxu0 1.0
    %548 = vmatpush.msra.mxu0 1.0
    %549 = vmatpush.msra.mxu0 1.0
    %550 = vmatpush.msra.mxu0 1.0
    %551 = vmatpush.msra.mxu0 1.0
    %552 = vmatpush.msra.mxu0 1.0
    %553 = vmatpush.msra.mxu0 1.0
    %554 = vmatpush.msra.mxu0 1.0
    %555 = vmatpush.msra.mxu0 1.0
    %556 = vmatmul.f32.gmra.mxu0 %v519
    %v557 = vpop.f32.mrf.mxu0
    %v558 = vadd.f32 %v538, %v557
    %559 = vdwg.mxu0
    %v560 = vmul.f32 %v558, 0.00390625
    %v561 = vadd.f32 %v560, 1e-05
    %v562 = vrsqrt.pop %v561
    %v563 = vmul.f32 %v562, %v561
    %v564 = vmul.f32 %v563, %v562
    %v565 = vmul.f32 0.5, %v564
    %v566 = vsub.f32 1.5, %v565
    %v567 = vmul.f32 %v562, %v566
    %vm568 = vweird.f32 %v561
    %vm569 = vweird.f32 %v562
    %vm570 = vmor %vm568, %vm569
    %v571 = vsel %vm570, %v562, %v567
    %573 = vset.pattern.permute.xlu0 0
    %574 = vperm.xlu0 %573, %v571
    %v575 = vpop.permute.xlu0 %574
    %v577 = vmul.f32 %v516, %v575
    %v578 = vmul.f32 %v517, %v575
    %v579 = vperm.slane %v200, 4
    %v580 = vperm.slane %v201, 4
    %v581 = vmul.f32 %v577, %v579
    %v582 = vmul.f32 %v578, %v580
    %v583 = vperm.slane %v200, 5
    %v584 = vperm.slane %v201, 5
    %v585 = vadd.f32 %v581, %v583
    %v586 = vadd.f32 %v582, %v584
    %v587 = vmax.f32 %v585, 0.0
    %v588 = vmax.f32 %v586, 0.0
    %v589 = vld [vmem:[#allocation8] sm:$0xff]
    %v590 = vld [vmem:[#allocation8 + $0x8] sm:$0xff]
    %v591 = vld [vmem:[#allocation8 + $0x10] sm:$0xff]
    %v592 = vld [vmem:[#allocation8 + $0x18] sm:$0xff]
    %v593 = vld [vmem:[#allocation8 + $0x20] sm:$0xff]
    %v594 = vld [vmem:[#allocation8 + $0x28] sm:$0xff]
    %v595 = vld [vmem:[#allocation8 + $0x30] sm:$0xff]
    %v596 = vld [vmem:[#allocation8 + $0x38] sm:$0xff]
    %v597 = vld [vmem:[#allocation8 + $0x40] sm:$0xff]
    %v598 = vld [vmem:[#allocation8 + $0x48] sm:$0xff]
    %v599 = vld [vmem:[#allocation8 + $0x50] sm:$0xff]
    %v600 = vld [vmem:[#allocation8 + $0x58] sm:$0xff]
    %v601 = vld [vmem:[#allocation8 + $0x60] sm:$0xff]
    %v602 = vld [vmem:[#allocation8 + $0x68] sm:$0xff]
    %v603 = vld [vmem:[#allocation8 + $0x70] sm:$0xff]
    %v604 = vld [vmem:[#allocation8 + $0x78] sm:$0xff]
    %v605 = vld [vmem:[#allocation8 + $0x80] sm:$0xff]
    %v606 = vld [vmem:[#allocation8 + $0x88] sm:$0xff]
    %v607 = vld [vmem:[#allocation8 + $0x90] sm:$0xff]
    %v608 = vld [vmem:[#allocation8 + $0x98] sm:$0xff]
    %v609 = vld [vmem:[#allocation8 + $0xa0] sm:$0xff]
    %v610 = vld [vmem:[#allocation8 + $0xa8] sm:$0xff]
    %v611 = vld [vmem:[#allocation8 + $0xb0] sm:$0xff]
    %v612 = vld [vmem:[#allocation8 + $0xb8] sm:$0xff]
    %v613 = vld [vmem:[#allocation8 + $0xc0] sm:$0xff]
    %v614 = vld [vmem:[#allocation8 + $0xc8] sm:$0xff]
    %v615 = vld [vmem:[#allocation8 + $0xd0] sm:$0xff]
    %v616 = vld [vmem:[#allocation8 + $0xd8] sm:$0xff]
    %v617 = vld [vmem:[#allocation8 + $0xe0] sm:$0xff]
    %v618 = vld [vmem:[#allocation8 + $0xe8] sm:$0xff]
    %v619 = vld [vmem:[#allocation8 + $0xf0] sm:$0xff]
    %v620 = vld [vmem:[#allocation8 + $0xf8] sm:$0xff]
    %v621 = vperm.slane %v200, 6
    %622 = vmatpush.msra.mxu0 %v604
    %623 = vmatpush.msra.mxu0 %v603
    %624 = vmatpush.msra.mxu0 %v602
    %625 = vmatpush.msra.mxu0 %v601
    %626 = vmatpush.msra.mxu0 %v600
    %627 = vmatpush.msra.mxu0 %v599
    %628 = vmatpush.msra.mxu0 %v598
    %629 = vmatpush.msra.mxu0 %v597
    %630 = vmatpush.msra.mxu0 %v596
    %631 = vmatpush.msra.mxu0 %v595
    %632 = vmatpush.msra.mxu0 %v594
    %633 = vmatpush.msra.mxu0 %v593
    %634 = vmatpush.msra.mxu0 %v592
    %635 = vmatpush.msra.mxu0 %v591
    %636 = vmatpush.msra.mxu0 %v590
    %637 = vmatpush.msra.mxu0 %v589
    %638 = vmatmul.f32.gmra.mxu0 %v587
    %v639 = vpop.f32.mrf.mxu0
    %v640 = vadd.f32 %v621, %v639
    %641 = vdwg.mxu0
    %642 = vmatpush.msra.mxu0 %v620
    %643 = vmatpush.msra.mxu0 %v619
    %644 = vmatpush.msra.mxu0 %v618
    %645 = vmatpush.msra.mxu0 %v617
    %646 = vmatpush.msra.mxu0 %v616
    %647 = vmatpush.msra.mxu0 %v615
    %648 = vmatpush.msra.mxu0 %v614
    %649 = vmatpush.msra.mxu0 %v613
    %650 = vmatpush.msra.mxu0 %v612
    %651 = vmatpush.msra.mxu0 %v611
    %652 = vmatpush.msra.mxu0 %v610
    %653 = vmatpush.msra.mxu0 %v609
    %654 = vmatpush.msra.mxu0 %v608
    %655 = vmatpush.msra.mxu0 %v607
    %656 = vmatpush.msra.mxu0 %v606
    %657 = vmatpush.msra.mxu0 %v605
    %658 = vmatmul.f32.gmra.mxu0 %v588
    %v659 = vpop.f32.mrf.mxu0
    %v660 = vadd.f32 %v640, %v659
    %661 = vdwg.mxu0
    %662 = vmatpush.msra.mxu0 1.0
    %663 = vmatpush.msra.mxu0 1.0
    %664 = vmatpush.msra.mxu0 1.0
    %665 = vmatpush.msra.mxu0 1.0
    %666 = vmatpush.msra.mxu0 1.0
    %667 = vmatpush.msra.mxu0 1.0
    %668 = vmatpush.msra.mxu0 1.0
    %669 = vmatpush.msra.mxu0 1.0
    %670 = vmatpush.msra.mxu0 1.0
    %671 = vmatpush.msra.mxu0 1.0
    %672 = vmatpush.msra.mxu0 1.0
    %673 = vmatpush.msra.mxu0 1.0
    %674 = vmatpush.msra.mxu0 1.0
    %675 = vmatpush.msra.mxu0 1.0
    %676 = vmatpush.msra.mxu0 1.0
    %677 = vmatpush.msra.mxu0 1.0
    %678 = vmatmul.f32.gmra.mxu0 %v660
    %v679 = vpop.f32.mrf.mxu0
    %v680 = vadd.f32 0.0, %v679
    %681 = vdwg.mxu0
    %v682 = vmul.f32 %v680, 0.0078125
    %684 = vset.pattern.permute.xlu0 0
    %685 = vperm.xlu0 %684, %v682
    %v686 = vpop.permute.xlu0 %685
    %v688 = vsub.f32 %v660, %v686
    %v689 = vmul.f32 %v688, %v688
    %690 = vmatpush.msra.mxu0 1.0
    %691 = vmatpush.msra.mxu0 1.0
    %692 = vmatpush.msra.mxu0 1.0
    %693 = vmatpush.msra.mxu0 1.0
    %694 = vmatpush.msra.mxu0 1.0
    %695 = vmatpush.msra.mxu0 1.0
    %696 = vmatpush.msra.mxu0 1.0
    %697 = vmatpush.msra.mxu0 1.0
    %698 = vmatpush.msra.mxu0 1.0
    %699 = vmatpush.msra.mxu0 1.0
    %700 = vmatpush.msra.mxu0 1.0
    %701 = vmatpush.msra.mxu0 1.0
    %702 = vmatpush.msra.mxu0 1.0
    %703 = vmatpush.msra.mxu0 1.0
    %704 = vmatpush.msra.mxu0 1.0
    %705 = vmatpush.msra.mxu0 1.0
    %706 = vmatmul.f32.gmra.mxu0 %v689
    %v707 = vpop.f32.mrf.mxu0
    %v708 = vadd.f32 0.0, %v707
    %709 = vdwg.mxu0
    %v710 = vmul.f32 %v708, 0.0078125
    %v711 = vadd.f32 %v710, 1e-05
    %v712 = vrsqrt.pop %v711
    %v713 = vmul.f32 %v712, %v711
    %v714 = vmul.f32 %v713, %v712
    %v715 = vmul.f32 0.5, %v714
    %v716 = vsub.f32 1.5, %v715
    %v717 = vmul.f32 %v712, %v716
    %vm718 = vweird.f32 %v711
    %vm719 = vweird.f32 %v712
    %vm720 = vmor %vm718, %vm719
    %v721 = vsel %vm720, %v712, %v717
    %723 = vset.pattern.permute.xlu0 0
    %724 = vperm.xlu0 %723, %v721
    %v725 = vpop.permute.xlu0 %724
    %v727 = vmul.f32 %v688, %v725
    %v728 = vperm.slane %v200, 7
    %v729 = vmul.f32 %v727, %v728
    %v730 = vperm.slane %v201, 7
    %v731 = vadd.f32 %v729, %v730
    %v732 = vmax.f32 %v731, 0.0
    %v733 = vld [vmem:[#allocation10] sm:$0xff]
    %v734 = vld [vmem:[#allocation10 + $0x8] sm:$0xff]
    %v735 = vld [vmem:[#allocation10 + $0x10] sm:$0xff]
    %v736 = vld [vmem:[#allocation10 + $0x18] sm:$0xff]
    %v737 = vld [vmem:[#allocation10 + $0x20] sm:$0xff]
    %v738 = vld [vmem:[#allocation10 + $0x28] sm:$0xff]
    %v739 = vld [vmem:[#allocation10 + $0x30] sm:$0xff]
    %v740 = vld [vmem:[#allocation10 + $0x38] sm:$0xff]
    %v741 = vld [vmem:[#allocation10 + $0x40] sm:$0xff]
    %v742 = vld [vmem:[#allocation10 + $0x48] sm:$0xff]
    %v743 = vld [vmem:[#allocation10 + $0x50] sm:$0xff]
    %v744 = vld [vmem:[#allocation10 + $0x58] sm:$0xff]
    %v745 = vld [vmem:[#allocation10 + $0x60] sm:$0xff]
    %v746 = vld [vmem:[#allocation10 + $0x68] sm:$0xff]
    %v747 = vld [vmem:[#allocation10 + $0x70] sm:$0xff]
    %v748 = vld [vmem:[#allocation10 + $0x78] sm:$0xff]
    %v749 = vperm.slane %v201, 6
    %750 = vmatpush.msra.mxu0 %v748
    %751 = vmatpush.msra.mxu0 %v747
    %752 = vmatpush.msra.mxu0 %v746
    %753 = vmatpush.msra.mxu0 %v745
    %754 = vmatpush.msra.mxu0 %v744
    %755 = vmatpush.msra.mxu0 %v743
    %756 = vmatpush.msra.mxu0 %v742
    %757 = vmatpush.msra.mxu0 %v741
    %758 = vmatpush.msra.mxu0 %v740
    %759 = vmatpush.msra.mxu0 %v739
    %760 = vmatpush.msra.mxu0 %v738
    %761 = vmatpush.msra.mxu0 %v737
    %762 = vmatpush.msra.mxu0 %v736
    %763 = vmatpush.msra.mxu0 %v735
    %764 = vmatpush.msra.mxu0 %v734
    %765 = vmatpush.msra.mxu0 %v733
    %766 = vmatmul.f32.gmra.mxu0 %v732
    %v767 = vpop.f32.mrf.mxu0
    %v768 = vadd.f32 %v749, %v767
    %769 = vdwg.mxu0
    %770 = vmax.xlane.f32.xlu0 %v768
    %v771 = vpop.xlane.xlu0 %770
    %v772 = vsub.f32 %v768, %v771
    %v773 = vmul.f32 %v772, 1.442695
    %v774 = vpow.pop %v773
    %775 = vmatpush.msra.mxu0 1.0
    %776 = vmatpush.msra.mxu0 1.0
    %777 = vmatpush.msra.mxu0 1.0
    %778 = vmatpush.msra.mxu0 1.0
    %779 = vmatpush.msra.mxu0 1.0
    %780 = vmatpush.msra.mxu0 1.0
    %781 = vmatpush.msra.mxu0 1.0
    %782 = vmatpush.msra.mxu0 1.0
    %783 = vmatpush.msra.mxu0 1.0
    %784 = vmatpush.msra.mxu0 1.0
    %785 = vmatpush.msra.mxu0 1.0
    %786 = vmatpush.msra.mxu0 1.0
    %787 = vmatpush.msra.mxu0 1.0
    %788 = vmatpush.msra.mxu0 1.0
    %789 = vmatpush.msra.mxu0 1.0
    %790 = vmatpush.msra.mxu0 1.0
    %791 = vmatmul.f32.gmra.mxu0 %v774
    %v792 = vpop.f32.mrf.mxu0
    %v793 = vadd.f32 0.0, %v792
    %794 = vdwg.mxu0
    %v795 = vrcp.pop %v793
    %v796 = vmul.f32 %v793, %v795
    %v797 = vsub.f32 2.0, %v796
    %v798 = vmul.f32 %v795, %v797
    %800 = vset.pattern.permute.xlu0 0
    %801 = vperm.xlu0 %800, %v798
    %v802 = vpop.permute.xlu0 %801
    %v804 = vmul.f32 %v774, %v802
    %v805 = vld [vmem:[#allocation11] sm:$0xff]
    %v806 = vld [vmem:[#allocation11 + $0x8] sm:$0xff]
    %v807 = vld [vmem:[#allocation11 + $0x10] sm:$0xff]
    %v808 = vld [vmem:[#allocation11 + $0x18] sm:$0xff]
    %v809 = vld [vmem:[#allocation11 + $0x20] sm:$0xff]
    %v810 = vld [vmem:[#allocation11 + $0x28] sm:$0xff]
    %v811 = vld [vmem:[#allocation11 + $0x30] sm:$0xff]
    %v812 = vld [vmem:[#allocation11 + $0x38] sm:$0xff]
    %v813 = vld [vmem:[#allocation11 + $0x40] sm:$0xff]
    %v814 = vld [vmem:[#allocation11 + $0x48] sm:$0xff]
    %v815 = vld [vmem:[#allocation11 + $0x50] sm:$0xff]
    %v816 = vld [vmem:[#allocation11 + $0x58] sm:$0xff]
    %v817 = vld [vmem:[#allocation11 + $0x60] sm:$0xff]
    %v818 = vld [vmem:[#allocation11 + $0x68] sm:$0xff]
    %v819 = vld [vmem:[#allocation11 + $0x70] sm:$0xff]
    %v820 = vld [vmem:[#allocation11 + $0x78] sm:$0xff]
    %v821 = vperm.slane %v202, 0
    %822 = vmatpush.msra.mxu0 %v820
    %823 = vmatpush.msra.mxu0 %v819
    %824 = vmatpush.msra.mxu0 %v818
    %825 = vmatpush.msra.mxu0 %v817
    %826 = vmatpush.msra.mxu0 %v816
    %827 = vmatpush.msra.mxu0 %v815
    %828 = vmatpush.msra.mxu0 %v814
    %829 = vmatpush.msra.mxu0 %v813
    %830 = vmatpush.msra.mxu0 %v812
    %831 = vmatpush.msra.mxu0 %v811
    %832 = vmatpush.msra.mxu0 %v810
    %833 = vmatpush.msra.mxu0 %v809
    %834 = vmatpush.msra.mxu0 %v808
    %835 = vmatpush.msra.mxu0 %v807
    %836 = vmatpush.msra.mxu0 %v806
    %837 = vmatpush.msra.mxu0 %v805
    %838 = vmatmul.f32.gmra.mxu0 %v395
    %v839 = vpop.f32.mrf.mxu0
    %v840 = vadd.f32 %v821, %v839
    %841 = vdwg.mxu0
    %842 = vmatpush.msra.mxu0 %v199
    %843 = vmatpush.msra.mxu0 %v198
    %844 = vmatpush.msra.mxu0 %v197
    %845 = vmatpush.msra.mxu0 %v196
    %846 = vmatpush.msra.mxu0 %v195
    %847 = vmatpush.msra.mxu0 %v194
    %848 = vmatpush.msra.mxu0 %v193
    %849 = vmatpush.msra.mxu0 %v192
    %850 = vmatpush.msra.mxu0 %v191
    %851 = vmatpush.msra.mxu0 %v190
    %852 = vmatpush.msra.mxu0 %v189
    %853 = vmatpush.msra.mxu0 %v188
    %854 = vmatpush.msra.mxu0 %v187
    %855 = vmatpush.msra.mxu0 %v186
    %856 = vmatpush.msra.mxu0 %v185
    %857 = vmatpush.msra.mxu0 %v184
    %858 = vmatmul.f32.gmra.mxu0 %v840
    %v859 = vpop.f32.mrf.mxu0
    %v860 = vadd.f32 0.0, %v859
    %861 = vdwg.mxu0
    %v862 = vmul.f32 %v860, 0.015625
    %864 = vset.pattern.permute.xlu0 0
    %865 = vperm.xlu0 %864, %v862
    %v866 = vpop.permute.xlu0 %865
    %v868 = vsub.f32 %v840, %v866
    %v869 = vmul.f32 %v868, %v868
    %870 = vmatpush.msra.mxu0 %v199
    %871 = vmatpush.msra.mxu0 %v198
    %872 = vmatpush.msra.mxu0 %v197
    %873 = vmatpush.msra.mxu0 %v196
    %874 = vmatpush.msra.mxu0 %v195
    %875 = vmatpush.msra.mxu0 %v194
    %876 = vmatpush.msra.mxu0 %v193
    %877 = vmatpush.msra.mxu0 %v192
    %878 = vmatpush.msra.mxu0 %v191
    %879 = vmatpush.msra.mxu0 %v190
    %880 = vmatpush.msra.mxu0 %v189
    %881 = vmatpush.msra.mxu0 %v188
    %882 = vmatpush.msra.mxu0 %v187
    %883 = vmatpush.msra.mxu0 %v186
    %884 = vmatpush.msra.mxu0 %v185
    %885 = vmatpush.msra.mxu0 %v184
    %886 = vmatmul.f32.gmra.mxu0 %v869
    %v887 = vpop.f32.mrf.mxu0
    %v888 = vadd.f32 0.0, %v887
    %889 = vdwg.mxu0
    %v890 = vmul.f32 %v888, 0.015625
    %v891 = vadd.f32 %v890, 1e-05
    %v892 = vrsqrt.pop %v891
    %v893 = vmul.f32 %v892, %v891
    %v894 = vmul.f32 %v893, %v892
    %v895 = vmul.f32 0.5, %v894
    %v896 = vsub.f32 1.5, %v895
    %v897 = vmul.f32 %v892, %v896
    %vm898 = vweird.f32 %v891
    %vm899 = vweird.f32 %v892
    %vm900 = vmor %vm898, %vm899
    %v901 = vsel %vm900, %v892, %v897
    %903 = vset.pattern.permute.xlu0 0
    %904 = vperm.xlu0 %903, %v901
    %v905 = vpop.permute.xlu0 %904
    %v907 = vmul.f32 %v868, %v905
    %v908 = vperm.slane %v203, 0
    %v909 = vmul.f32 %v907, %v908
    %v910 = vperm.slane %v202, 1
    %v911 = vadd.f32 %v909, %v910
    %v912 = vmax.f32 %v911, 0.0
    %v913 = vperm.slane %v203, 1
    %v914 = vmul.f32 %v912, %v913
    %915 = vmatpush.msra.mxu0 1.0
    %916 = vmatpush.msra.mxu0 1.0
    %917 = vmatpush.msra.mxu0 1.0
    %918 = vmatpush.msra.mxu0 1.0
    %919 = vmatpush.msra.mxu0 1.0
    %920 = vmatpush.msra.mxu0 1.0
    %921 = vmatpush.msra.mxu0 1.0
    %922 = vmatpush.msra.mxu0 1.0
    %923 = vmatpush.msra.mxu0 1.0
    %924 = vmatpush.msra.mxu0 1.0
    %925 = vmatpush.msra.mxu0 1.0
    %926 = vmatpush.msra.mxu0 1.0
    %927 = vmatpush.msra.mxu0 1.0
    %928 = vmatpush.msra.mxu0 1.0
    %929 = vmatpush.msra.mxu0 1.0
    %930 = vmatpush.msra.mxu0 1.0
    %931 = vmatmul.f32.gmra.mxu0 %v914
    %v932 = vpop.f32.mrf.mxu0
    %v933 = vadd.f32 0.0, %v932
    %934 = vdwg.mxu0
    %v935 = vlaneseq
    %v936 = vand.u32 %v935, 127
    %vm937 = vcmp.eq.s32.totalorder %v936, 4
    %939 = vset.pattern.permute.xlu0 0
    %940 = vperm.xlu0 %939, %v933
    %v941 = vpop.permute.xlu0 %940
    %v943 = vsel %vm937, %v941, 0.0
    %v944 = vadd.f32 %v804, %v943
    %945 = vst [vmem:[#allocation14] sm:$0xff] %v944
    // Predicated region
    $region58: #{tpu_custom_call.1} parent=1 // pred_check
      _
    $region59: #{tpu_custom_call.1} parent=1 // pred_check_branch
      %947 = sbr.rel (0) target = $region61
    $region60: #{tpu_custom_call.1} parent=1 // pred_region
      %949 = vsyncadd [#allocation4], 0
      %s951 = sshll.u32 [#allocation14], 4
      %s952 = int_to_ptr.vmem [resolvable:$true] %s951
      %s953 = sshll.u32 %s7, 4
      %s954 = int_to_ptr.hbm [resolvable:$true] %s953
      %956 = dma.vmem_to_hbm [thread:$0]  %s952, 128, %s954, [#allocation4]
    $region61: #{tpu_custom_call.1} parent=1 // pred_fallthru
      _
    // Predicated region
    $region62: #{tpu_custom_call.1} parent=1 // pred_check
      _
    $region63: #{tpu_custom_call.1} parent=1 // pred_check_branch
      %958 = sbr.rel (0) target = $region65
    $region64: #{tpu_custom_call.1} parent=1 // pred_region
      %960 = dma.done [#allocation4], 128
    $region65: #{tpu_custom_call.1} parent=1 // pred_fallthru
      _
    %961 = vsyncpa [#allocation3], 1
    %962 = vsyncpa [#allocation6], 1
    %963 = vsyncpa [#allocation9], 1
    %964 = vsyncpa [#allocation12], 1
    %965 = vsyncpa [#allocation4], 1

</llo_original>
